<compile_context>
chip_gen: v7x
topology: tpu7x:2x2x1
jax: 0.10.0
libtpu: 0.0.40
codegen_flags: <defaults>
</compile_context>

<pallas_src>
import math

import jax
import jax.numpy as jnp
from jax.experimental import pallas as pl
from jax.experimental.pallas import tpu as pltpu

# ----------------------- model hyper-parameters (small) ---------------------
B = 2            # batch
S = 8            # seq_len
BS = B * S       # flattened rows
D = 32           # dim_model
H = 4            # heads
DK = D // H      # head dim
U = 64           # feed-forward units
VOCAB = 50
EPS = 1e-6
NEG_INF = -1e9


# ------------------------------- Pallas kernel ------------------------------
def decoder_kernel(tok_ref, emb_ref, pe_ref, ex_ref, tmask_ref, smask_ref,
                   w_qkvq_ref, b_qkvq_ref, w_kv_ref, b_kv_ref,
                   wo_ref, bo_ref, wff1_ref, bff1_ref, wff2_ref, bff2_ref,
                   ln_ref, out_ref):
    # ---- embedding (one-hot matmul; sqrt(D) pre-folded into the table) + PE
    tok = tok_ref[...]                                           # (BS, 1) int32
    vocab_iota = jax.lax.broadcasted_iota(jnp.int32, (BS, VOCAB), 1)
    onehot = (vocab_iota == tok).astype(jnp.float32)             # (BS, VOCAB)
    emb = jnp.dot(onehot, emb_ref[...], preferred_element_type=jnp.float32)
    pos = emb + pe_ref[...]                                      # (BS, D)

    ex = ex_ref[...]                                             # (BS, D)

    def linear(x, w, b):
        return jnp.dot(x, w, preferred_element_type=jnp.float32) + b

    def softmax(sc):
        m = jnp.max(sc, axis=-1, keepdims=True)
        e = jnp.exp(sc - m)
        return e * pl.reciprocal(jnp.sum(e, axis=-1, keepdims=True), approx=True)

    def split_heads(x):  # (BS, D) -> (H, BS, DK)
        return jnp.stack([x[:, h * DK:(h + 1) * DK] for h in range(H)], axis=0)

    def attention(q, k, v, mask_add, wo, bo):
        # q/k/v: (BS, D). 1/sqrt(DK) is already folded into the Q projection.
        qh, kh, vh = split_heads(q), split_heads(k), split_heads(v)
        sc = jnp.einsum('hqd,hkd->hqk', qh, kh,
                        preferred_element_type=jnp.float32)      # (H, BS, BS)
        p = softmax(sc + mask_add[None])                         # additive mask
        ctx = jnp.einsum('hqk,hkd->hqd', p, vh,
                         preferred_element_type=jnp.float32)     # (H, BS, DK)
        attn = jnp.concatenate([ctx[h] for h in range(H)], axis=-1)  # (BS, D)
        return linear(attn, wo, bo)

    def layernorm(x, idx):
        alpha = ln_ref[2 * idx]
        bias = ln_ref[2 * idx + 1]
        mean = jnp.mean(x, axis=-1, keepdims=True)
        num = x - mean
        # unbiased variance (N-1), matching torch.Tensor.std default
        var = jnp.sum(num * num, axis=-1, keepdims=True) * (1.0 / (D - 1))
        return alpha * num * jax.lax.rsqrt(var + EPS) + bias

    # ---- fused, lane-dense projections
    qkvq = linear(pos, w_qkvq_ref[...], b_qkvq_ref[...])         # (BS, 4D)
    q_self = qkvq[:, 0:D]
    k_self = qkvq[:, D:2 * D]
    v_self = qkvq[:, 2 * D:3 * D]
    q_cross = qkvq[:, 3 * D:4 * D]

    kv = linear(ex, w_kv_ref[...], b_kv_ref[...])                # (BS, 2D)
    k_cross = kv[:, 0:D]
    v_cross = kv[:, D:2 * D]

    # ---- decoder block
    mmha = attention(q_self, k_self, v_self, tmask_ref[...], wo_ref[0], bo_ref[0])
    n1 = layernorm(mmha + pos, 0)
    cross = attention(q_cross, k_cross, v_cross, smask_ref[...], wo_ref[1], bo_ref[1])
    n2 = layernorm(cross + n1, 1)
    h1 = jnp.maximum(linear(n2, wff1_ref[...], bff1_ref[...]), 0.0)
    ff = linear(h1, wff2_ref[...], bff2_ref[...])
    # TODO(synk): output is (16, 32), i.e. a masked 32/128-lane store; lane-dense
    # (.., 128) repacking skipped — negligible at this size.
    out_ref[...] = layernorm(n2 + ff, 2)


# ------------------------------ wrapper --------------------------------------
def _make_additive_mask(mask_bss):
    """(B,S,S) 0/1 mask -> additive (BS,BS) block-diagonal mask for flat batch."""
    blocks = jnp.where(mask_bss == 0, NEG_INF, 0.0).astype(jnp.float32)  # (B,S,S)
    full = jnp.full((B, S, B, S), NEG_INF, jnp.float32)
    bidx = jnp.arange(B)
    full = full.at[bidx, :, bidx, :].set(blocks)
    return full.reshape(BS, BS)


def decoder_forward(tokens, ex, tgt_mask, src_mask, params, emb_table, pe):
    (w_qkvq, b_qkvq, w_kv, b_kv, w_o, b_o,
     w_ff1, b_ff1, w_ff2, b_ff2, ln_flat) = params

    tok_flat = tokens.reshape(BS, 1).astype(jnp.int32)
    ex_flat = ex.reshape(BS, D)
    pe_tiled = jnp.tile(pe, (B, 1))                      # (BS, D)
    tmask_add = _make_additive_mask(tgt_mask)
    smask_add = _make_additive_mask(src_mask)

    vmem = pl.BlockSpec(memory_space=pltpu.MemorySpace.VMEM)
    smem = pl.BlockSpec(memory_space=pltpu.MemorySpace.SMEM)

    out = pl.pallas_call(
        decoder_kernel,
        out_shape=jax.ShapeDtypeStruct((BS, D), jnp.float32),
        in_specs=[vmem] * 16 + [smem],
        out_specs=vmem,
    )(tok_flat, emb_table, pe_tiled, ex_flat, tmask_add, smask_add,
      w_qkvq, b_qkvq, w_kv, b_kv, w_o, b_o,
      w_ff1, b_ff1, w_ff2, b_ff2, ln_flat)
    return out.reshape(B, S, D)


# -------------------------- parameter construction ---------------------------
def make_params(key):
    keys = jax.random.split(key, 8)
    scale = 0.02
    inv_sqrt_dk = 1.0 / math.sqrt(DK)
    # 8 (D,D) attention linears: self {q,k,v,o} then cross {q,k,v,o}
    w = jax.random.normal(keys[0], (8, D, D), jnp.float32) * scale
    b = jax.random.normal(keys[1], (8, D), jnp.float32) * scale
    # fold 1/sqrt(dk) into the two Q projections (weights AND biases)
    w_qkvq = jnp.concatenate(
        [w[0] * inv_sqrt_dk, w[1], w[2], w[4] * inv_sqrt_dk], axis=1)   # (D, 4D)
    b_qkvq = jnp.concatenate(
        [b[0] * inv_sqrt_dk, b[1], b[2], b[4] * inv_sqrt_dk])[None, :]  # (1, 4D)
    w_kv = jnp.concatenate([w[5], w[6]], axis=1)                        # (D, 2D)
    b_kv = jnp.concatenate([b[5], b[6]])[None, :]                       # (1, 2D)
    w_o = jnp.stack([w[3], w[7]])                                       # (2, D, D)
    b_o = jnp.stack([b[3], b[7]])[:, None, :]                           # (2, 1, D)
    w_ff1 = jax.random.normal(keys[2], (D, U), jnp.float32) * scale
    b_ff1 = jax.random.normal(keys[3], (1, U), jnp.float32) * scale
    w_ff2 = jax.random.normal(keys[4], (U, D), jnp.float32) * scale
    b_ff2 = jax.random.normal(keys[5], (1, D), jnp.float32) * scale
    # three LayerNorms, scalar alpha=1 / bias=0, flattened 1-D for SMEM
    ln_flat = jnp.array([1.0, 0.0, 1.0, 0.0, 1.0, 0.0], jnp.float32)    # (6,)
    # embedding table with the InputEmbeddings sqrt(D) scale pre-folded (one-time)
    emb_table = jax.random.normal(keys[6], (VOCAB, D), jnp.float32) * scale
    emb_table = emb_table * math.sqrt(D)
    return (w_qkvq, b_qkvq, w_kv, b_kv, w_o, b_o,
            w_ff1, b_ff1, w_ff2, b_ff2, ln_flat), emb_table


def positional_encodings():
    pos_idx = jnp.arange(S, dtype=jnp.float32)[:, None]
    denom = jnp.exp(jnp.arange(0, D, 2, dtype=jnp.float32)
                    * (-math.log(10000.0) / D))
    pe = jnp.zeros((S, D), jnp.float32)
    pe = pe.at[:, 0::2].set(jnp.sin(pos_idx * denom))
    pe = pe.at[:, 1::2].set(jnp.cos(pos_idx * denom))
    return pe


if __name__ == "__main__":
    key = jax.random.PRNGKey(0)
    k_tok, k_ex, k_param = jax.random.split(key, 3)

    # inputs
    tokens = jax.random.randint(k_tok, (B, S), 0, VOCAB)          # token ids
    ex = jax.random.normal(k_ex, (B, S, D), jnp.float32)          # encoder out
    tgt_mask = jnp.tril(jnp.ones((S, S), jnp.float32))[None].repeat(B, 0)
    src_mask = jnp.ones((B, S, S), jnp.float32)

    params, emb_table = make_params(k_param)
    pe = positional_encodings()

    out = decoder_forward(tokens, ex, tgt_mask, src_mask, params, emb_table, pe)
    out = jax.block_until_ready(out)
    assert out.shape == (B, S, D)
    assert bool(jnp.all(jnp.isfinite(out)))
    print("KERNEL_OK")
</pallas_src>

<mosaic_0001>
module attributes {stable_mosaic.version = 11 : i64} {
  func.func @decoder_kernel(%arg0: memref<16x1xi32, #tpu.memory_space<vmem>>, %arg1: memref<50x32xf32, #tpu.memory_space<vmem>>, %arg2: memref<16x32xf32, #tpu.memory_space<vmem>>, %arg3: memref<16x32xf32, #tpu.memory_space<vmem>>, %arg4: memref<16x16xf32, #tpu.memory_space<vmem>>, %arg5: memref<16x16xf32, #tpu.memory_space<vmem>>, %arg6: memref<32x128xf32, #tpu.memory_space<vmem>>, %arg7: memref<1x128xf32, #tpu.memory_space<vmem>>, %arg8: memref<32x64xf32, #tpu.memory_space<vmem>>, %arg9: memref<1x64xf32, #tpu.memory_space<vmem>>, %arg10: memref<2x32x32xf32, #tpu.memory_space<vmem>>, %arg11: memref<2x1x32xf32, #tpu.memory_space<vmem>>, %arg12: memref<32x64xf32, #tpu.memory_space<vmem>>, %arg13: memref<1x64xf32, #tpu.memory_space<vmem>>, %arg14: memref<64x32xf32, #tpu.memory_space<vmem>>, %arg15: memref<1x32xf32, #tpu.memory_space<vmem>>, %arg16: memref<6xf32, #tpu.memory_space<smem>>, %arg17: memref<16x32xf32, #tpu.memory_space<vmem>>) attributes {dimension_semantics = [], scalar_prefetch = 0 : i64, scratch_operands = 0 : i64, tpu.core_type = #tpu.core_type<tc>} {
    %c0 = arith.constant 0 : index
    %c0_0 = arith.constant 0 : index
    %0 = vector.load %arg0[%c0, %c0_0] : memref<16x1xi32, #tpu.memory_space<vmem>>, vector<16x1xi32>
    %1 = tpu.iota {dimensions = array<i32: 1>} : vector<16x50xi32>
    %2 = vector.broadcast %0 : vector<16x1xi32> to vector<16x50xi32>
    %3 = arith.cmpi eq, %1, %2 : vector<16x50xi32>
    %4 = arith.extui %3 : vector<16x50xi1> to vector<16x50xi32>
    %5 = arith.sitofp %4 : vector<16x50xi32> to vector<16x50xf32>
    %c0_1 = arith.constant 0 : index
    %c0_2 = arith.constant 0 : index
    %6 = vector.load %arg1[%c0_1, %c0_2] : memref<50x32xf32, #tpu.memory_space<vmem>>, vector<50x32xf32>
    %cst = arith.constant dense<0.000000e+00> : vector<16x32xf32>
    %7 = tpu.matmul %5, %6, %cst {dimension_numbers = #tpu.dot_dimension_numbers<[1], [0], [0], [1], [0, 0, 1, 1], [], []>} : vector<16x50xf32>, vector<50x32xf32>, vector<16x32xf32> -> vector<16x32xf32>
    %c0_3 = arith.constant 0 : index
    %c0_4 = arith.constant 0 : index
    %8 = vector.load %arg2[%c0_3, %c0_4] : memref<16x32xf32, #tpu.memory_space<vmem>>, vector<16x32xf32>
    %9 = arith.addf %7, %8 : vector<16x32xf32>
    %c0_5 = arith.constant 0 : index
    %c0_6 = arith.constant 0 : index
    %10 = vector.load %arg3[%c0_5, %c0_6] : memref<16x32xf32, #tpu.memory_space<vmem>>, vector<16x32xf32>
    %c0_7 = arith.constant 0 : index
    %c0_8 = arith.constant 0 : index
    %11 = vector.load %arg6[%c0_7, %c0_8] : memref<32x128xf32, #tpu.memory_space<vmem>>, vector<32x128xf32>
    %c0_9 = arith.constant 0 : index
    %c0_10 = arith.constant 0 : index
    %12 = vector.load %arg7[%c0_9, %c0_10] : memref<1x128xf32, #tpu.memory_space<vmem>>, vector<1x128xf32>
    %cst_11 = arith.constant dense<0.000000e+00> : vector<16x128xf32>
    %13 = tpu.matmul %9, %11, %cst_11 {dimension_numbers = #tpu.dot_dimension_numbers<[1], [0], [0], [1], [0, 0, 1, 1], [], []>} : vector<16x32xf32>, vector<32x128xf32>, vector<16x128xf32> -> vector<16x128xf32>
    %14 = vector.broadcast %12 : vector<1x128xf32> to vector<16x128xf32>
    %15 = arith.addf %13, %14 : vector<16x128xf32>
    %16 = vector.extract_strided_slice %15 {offsets = [0, 0], sizes = [16, 32], strides = [1, 1]} : vector<16x128xf32> to vector<16x32xf32>
    %17 = vector.extract_strided_slice %15 {offsets = [0, 32], sizes = [16, 32], strides = [1, 1]} : vector<16x128xf32> to vector<16x32xf32>
    %18 = vector.extract_strided_slice %15 {offsets = [0, 64], sizes = [16, 32], strides = [1, 1]} : vector<16x128xf32> to vector<16x32xf32>
    %19 = vector.extract_strided_slice %15 {offsets = [0, 96], sizes = [16, 32], strides = [1, 1]} : vector<16x128xf32> to vector<16x32xf32>
    %c0_12 = arith.constant 0 : index
    %c0_13 = arith.constant 0 : index
    %20 = vector.load %arg8[%c0_12, %c0_13] : memref<32x64xf32, #tpu.memory_space<vmem>>, vector<32x64xf32>
    %c0_14 = arith.constant 0 : index
    %c0_15 = arith.constant 0 : index
    %21 = vector.load %arg9[%c0_14, %c0_15] : memref<1x64xf32, #tpu.memory_space<vmem>>, vector<1x64xf32>
    %cst_16 = arith.constant dense<0.000000e+00> : vector<16x64xf32>
    %22 = tpu.matmul %10, %20, %cst_16 {dimension_numbers = #tpu.dot_dimension_numbers<[1], [0], [0], [1], [0, 0, 1, 1], [], []>} : vector<16x32xf32>, vector<32x64xf32>, vector<16x64xf32> -> vector<16x64xf32>
    %23 = vector.broadcast %21 : vector<1x64xf32> to vector<16x64xf32>
    %24 = arith.addf %22, %23 : vector<16x64xf32>
    %25 = vector.extract_strided_slice %24 {offsets = [0, 0], sizes = [16, 32], strides = [1, 1]} : vector<16x64xf32> to vector<16x32xf32>
    %26 = vector.extract_strided_slice %24 {offsets = [0, 32], sizes = [16, 32], strides = [1, 1]} : vector<16x64xf32> to vector<16x32xf32>
    %c0_17 = arith.constant 0 : index
    %c0_18 = arith.constant 0 : index
    %27 = vector.load %arg4[%c0_17, %c0_18] : memref<16x16xf32, #tpu.memory_space<vmem>>, vector<16x16xf32>
    %c0_19 = arith.constant 0 : index
    %c0_20 = arith.constant 0 : index
    %c0_21 = arith.constant 0 : index
    %28 = vector.load %arg10[%c0_19, %c0_20, %c0_21] : memref<2x32x32xf32, #tpu.memory_space<vmem>>, vector<1x32x32xf32>
    %29 = vector.shape_cast %28 : vector<1x32x32xf32> to vector<32x32xf32>
    %c0_22 = arith.constant 0 : index
    %c0_23 = arith.constant 0 : index
    %c0_24 = arith.constant 0 : index
    %30 = vector.load %arg11[%c0_22, %c0_23, %c0_24] : memref<2x1x32xf32, #tpu.memory_space<vmem>>, vector<1x1x32xf32>
    %31 = vector.shape_cast %30 : vector<1x1x32xf32> to vector<1x32xf32>
    %32 = vector.extract_strided_slice %16 {offsets = [0, 0], sizes = [16, 8], strides = [1, 1]} : vector<16x32xf32> to vector<16x8xf32>
    %33 = vector.extract_strided_slice %16 {offsets = [0, 8], sizes = [16, 8], strides = [1, 1]} : vector<16x32xf32> to vector<16x8xf32>
    %34 = vector.extract_strided_slice %16 {offsets = [0, 16], sizes = [16, 8], strides = [1, 1]} : vector<16x32xf32> to vector<16x8xf32>
    %35 = vector.extract_strided_slice %16 {offsets = [0, 24], sizes = [16, 8], strides = [1, 1]} : vector<16x32xf32> to vector<16x8xf32>
    %36 = vector.shape_cast %32 : vector<16x8xf32> to vector<1x16x8xf32>
    %37 = vector.shape_cast %33 : vector<16x8xf32> to vector<1x16x8xf32>
    %38 = vector.shape_cast %34 : vector<16x8xf32> to vector<1x16x8xf32>
    %39 = vector.shape_cast %35 : vector<16x8xf32> to vector<1x16x8xf32>
    %40 = tpu.concatenate %36, %37, %38, %39 in 0 : vector<1x16x8xf32>, vector<1x16x8xf32>, vector<1x16x8xf32>, vector<1x16x8xf32> -> vector<4x16x8xf32>
    %41 = vector.extract_strided_slice %17 {offsets = [0, 0], sizes = [16, 8], strides = [1, 1]} : vector<16x32xf32> to vector<16x8xf32>
    %42 = vector.extract_strided_slice %17 {offsets = [0, 8], sizes = [16, 8], strides = [1, 1]} : vector<16x32xf32> to vector<16x8xf32>
    %43 = vector.extract_strided_slice %17 {offsets = [0, 16], sizes = [16, 8], strides = [1, 1]} : vector<16x32xf32> to vector<16x8xf32>
    %44 = vector.extract_strided_slice %17 {offsets = [0, 24], sizes = [16, 8], strides = [1, 1]} : vector<16x32xf32> to vector<16x8xf32>
    %45 = vector.shape_cast %41 : vector<16x8xf32> to vector<1x16x8xf32>
    %46 = vector.shape_cast %42 : vector<16x8xf32> to vector<1x16x8xf32>
    %47 = vector.shape_cast %43 : vector<16x8xf32> to vector<1x16x8xf32>
    %48 = vector.shape_cast %44 : vector<16x8xf32> to vector<1x16x8xf32>
    %49 = tpu.concatenate %45, %46, %47, %48 in 0 : vector<1x16x8xf32>, vector<1x16x8xf32>, vector<1x16x8xf32>, vector<1x16x8xf32> -> vector<4x16x8xf32>
    %50 = vector.extract_strided_slice %18 {offsets = [0, 0], sizes = [16, 8], strides = [1, 1]} : vector<16x32xf32> to vector<16x8xf32>
    %51 = vector.extract_strided_slice %18 {offsets = [0, 8], sizes = [16, 8], strides = [1, 1]} : vector<16x32xf32> to vector<16x8xf32>
    %52 = vector.extract_strided_slice %18 {offsets = [0, 16], sizes = [16, 8], strides = [1, 1]} : vector<16x32xf32> to vector<16x8xf32>
    %53 = vector.extract_strided_slice %18 {offsets = [0, 24], sizes = [16, 8], strides = [1, 1]} : vector<16x32xf32> to vector<16x8xf32>
    %54 = vector.shape_cast %50 : vector<16x8xf32> to vector<1x16x8xf32>
    %55 = vector.shape_cast %51 : vector<16x8xf32> to vector<1x16x8xf32>
    %56 = vector.shape_cast %52 : vector<16x8xf32> to vector<1x16x8xf32>
    %57 = vector.shape_cast %53 : vector<16x8xf32> to vector<1x16x8xf32>
    %58 = tpu.concatenate %54, %55, %56, %57 in 0 : vector<1x16x8xf32>, vector<1x16x8xf32>, vector<1x16x8xf32>, vector<1x16x8xf32> -> vector<4x16x8xf32>
    "tpu.trace_start"() <{level = 10 : i32, message = "hqd,hkd->hqk"}> : () -> ()
    %cst_25 = arith.constant dense<0.000000e+00> : vector<4x16x16xf32>
    %59 = tpu.matmul %40, %49, %cst_25 {dimension_numbers = #tpu.dot_dimension_numbers<[2], [2], [1], [1], [0, 0, 0, 1, 1, 1], [0], [0]>} : vector<4x16x8xf32>, vector<4x16x8xf32>, vector<4x16x16xf32> -> vector<4x16x16xf32>
    "tpu.trace_stop"() : () -> ()
    %60 = vector.shape_cast %27 : vector<16x16xf32> to vector<1x16x16xf32>
    %61 = vector.broadcast %60 : vector<1x16x16xf32> to vector<4x16x16xf32>
    %62 = arith.addf %59, %61 : vector<4x16x16xf32>
    %cst_26 = arith.constant dense<0xFF800000> : vector<4x16xf32>
    %63 = vector.multi_reduction <maximumf>, %62, %cst_26 [2] : vector<4x16x16xf32> to vector<4x16xf32>
    %64 = vector.shape_cast %63 : vector<4x16xf32> to vector<4x16x1xf32>
    %65 = vector.broadcast %64 : vector<4x16x1xf32> to vector<4x16x16xf32>
    %66 = arith.subf %62, %65 : vector<4x16x16xf32>
    %67 = math.exp %66 : vector<4x16x16xf32>
    %cst_27 = arith.constant dense<0.000000e+00> : vector<4x16xf32>
    %68 = vector.multi_reduction <add>, %67, %cst_27 [2] : vector<4x16x16xf32> to vector<4x16xf32>
    %69 = vector.shape_cast %68 : vector<4x16xf32> to vector<4x16x1xf32>
    %70 = tpu.reciprocal %69 {approx = true} : vector<4x16x1xf32> -> vector<4x16x1xf32>
    %71 = vector.broadcast %70 : vector<4x16x1xf32> to vector<4x16x16xf32>
    %72 = arith.mulf %67, %71 : vector<4x16x16xf32>
    "tpu.trace_start"() <{level = 10 : i32, message = "hqk,hkd->hqd"}> : () -> ()
    %cst_28 = arith.constant dense<0.000000e+00> : vector<4x16x8xf32>
    %73 = tpu.matmul %72, %58, %cst_28 {dimension_numbers = #tpu.dot_dimension_numbers<[2], [1], [1], [2], [0, 0, 0, 1, 1, 2], [0], [0]>} : vector<4x16x16xf32>, vector<4x16x8xf32>, vector<4x16x8xf32> -> vector<4x16x8xf32>
    "tpu.trace_stop"() : () -> ()
    %74 = vector.extract_strided_slice %73 {offsets = [0, 0, 0], sizes = [1, 16, 8], strides = [1, 1, 1]} : vector<4x16x8xf32> to vector<1x16x8xf32>
    %75 = vector.shape_cast %74 : vector<1x16x8xf32> to vector<16x8xf32>
    %76 = vector.extract_strided_slice %73 {offsets = [1, 0, 0], sizes = [1, 16, 8], strides = [1, 1, 1]} : vector<4x16x8xf32> to vector<1x16x8xf32>
    %77 = vector.shape_cast %76 : vector<1x16x8xf32> to vector<16x8xf32>
    %78 = vector.extract_strided_slice %73 {offsets = [2, 0, 0], sizes = [1, 16, 8], strides = [1, 1, 1]} : vector<4x16x8xf32> to vector<1x16x8xf32>
    %79 = vector.shape_cast %78 : vector<1x16x8xf32> to vector<16x8xf32>
    %80 = vector.extract_strided_slice %73 {offsets = [3, 0, 0], sizes = [1, 16, 8], strides = [1, 1, 1]} : vector<4x16x8xf32> to vector<1x16x8xf32>
    %81 = vector.shape_cast %80 : vector<1x16x8xf32> to vector<16x8xf32>
    %82 = tpu.concatenate %75, %77, %79, %81 in 1 : vector<16x8xf32>, vector<16x8xf32>, vector<16x8xf32>, vector<16x8xf32> -> vector<16x32xf32>
    %cst_29 = arith.constant dense<0.000000e+00> : vector<16x32xf32>
    %83 = tpu.matmul %82, %29, %cst_29 {dimension_numbers = #tpu.dot_dimension_numbers<[1], [0], [0], [1], [0, 0, 1, 1], [], []>} : vector<16x32xf32>, vector<32x32xf32>, vector<16x32xf32> -> vector<16x32xf32>
    %84 = vector.broadcast %31 : vector<1x32xf32> to vector<16x32xf32>
    %85 = arith.addf %83, %84 : vector<16x32xf32>
    %86 = arith.addf %85, %9 : vector<16x32xf32>
    %c0_30 = arith.constant 0 : index
    %87 = memref.load %arg16[%c0_30] : memref<6xf32, #tpu.memory_space<smem>>
    %c1 = arith.constant 1 : index
    %88 = memref.load %arg16[%c1] : memref<6xf32, #tpu.memory_space<smem>>
    %cst_31 = arith.constant dense<0.000000e+00> : vector<16xf32>
    %89 = vector.multi_reduction <add>, %86, %cst_31 [1] : vector<16x32xf32> to vector<16xf32>
    %90 = vector.shape_cast %89 : vector<16xf32> to vector<16x1xf32>
    %cst_32 = arith.constant 3.200000e+01 : f32
    %91 = vector.broadcast %cst_32 : f32 to vector<16x1xf32>
    %92 = arith.divf %90, %91 : vector<16x1xf32>
    %93 = vector.broadcast %92 : vector<16x1xf32> to vector<16x32xf32>
    %94 = arith.subf %86, %93 : vector<16x32xf32>
    %95 = arith.mulf %94, %94 : vector<16x32xf32>
    %cst_33 = arith.constant dense<0.000000e+00> : vector<16xf32>
    %96 = vector.multi_reduction <add>, %95, %cst_33 [1] : vector<16x32xf32> to vector<16xf32>
    %97 = vector.shape_cast %96 : vector<16xf32> to vector<16x1xf32>
    %cst_34 = arith.constant 0.0322580636 : f32
    %98 = vector.broadcast %cst_34 : f32 to vector<16x1xf32>
    %99 = arith.mulf %97, %98 : vector<16x1xf32>
    %100 = vector.broadcast %87 : f32 to vector<16x32xf32>
    %101 = arith.mulf %100, %94 : vector<16x32xf32>
    %cst_35 = arith.constant 9.99999997E-7 : f32
    %102 = vector.broadcast %cst_35 : f32 to vector<16x1xf32>
    %103 = arith.addf %99, %102 : vector<16x1xf32>
    %104 = math.rsqrt %103 : vector<16x1xf32>
    %105 = vector.broadcast %104 : vector<16x1xf32> to vector<16x32xf32>
    %106 = arith.mulf %101, %105 : vector<16x32xf32>
    %107 = vector.broadcast %88 : f32 to vector<16x32xf32>
    %108 = arith.addf %106, %107 : vector<16x32xf32>
    %c0_36 = arith.constant 0 : index
    %c0_37 = arith.constant 0 : index
    %109 = vector.load %arg5[%c0_36, %c0_37] : memref<16x16xf32, #tpu.memory_space<vmem>>, vector<16x16xf32>
    %c1_38 = arith.constant 1 : index
    %c0_39 = arith.constant 0 : index
    %c0_40 = arith.constant 0 : index
    %110 = vector.load %arg10[%c1_38, %c0_39, %c0_40] : memref<2x32x32xf32, #tpu.memory_space<vmem>>, vector<1x32x32xf32>
    %111 = vector.shape_cast %110 : vector<1x32x32xf32> to vector<32x32xf32>
    %c1_41 = arith.constant 1 : index
    %c0_42 = arith.constant 0 : index
    %c0_43 = arith.constant 0 : index
    %112 = vector.load %arg11[%c1_41, %c0_42, %c0_43] : memref<2x1x32xf32, #tpu.memory_space<vmem>>, vector<1x1x32xf32>
    %113 = vector.shape_cast %112 : vector<1x1x32xf32> to vector<1x32xf32>
    %114 = vector.extract_strided_slice %19 {offsets = [0, 0], sizes = [16, 8], strides = [1, 1]} : vector<16x32xf32> to vector<16x8xf32>
    %115 = vector.extract_strided_slice %19 {offsets = [0, 8], sizes = [16, 8], strides = [1, 1]} : vector<16x32xf32> to vector<16x8xf32>
    %116 = vector.extract_strided_slice %19 {offsets = [0, 16], sizes = [16, 8], strides = [1, 1]} : vector<16x32xf32> to vector<16x8xf32>
    %117 = vector.extract_strided_slice %19 {offsets = [0, 24], sizes = [16, 8], strides = [1, 1]} : vector<16x32xf32> to vector<16x8xf32>
    %118 = vector.shape_cast %114 : vector<16x8xf32> to vector<1x16x8xf32>
    %119 = vector.shape_cast %115 : vector<16x8xf32> to vector<1x16x8xf32>
    %120 = vector.shape_cast %116 : vector<16x8xf32> to vector<1x16x8xf32>
    %121 = vector.shape_cast %117 : vector<16x8xf32> to vector<1x16x8xf32>
    %122 = tpu.concatenate %118, %119, %120, %121 in 0 : vector<1x16x8xf32>, vector<1x16x8xf32>, vector<1x16x8xf32>, vector<1x16x8xf32> -> vector<4x16x8xf32>
    %123 = vector.extract_strided_slice %25 {offsets = [0, 0], sizes = [16, 8], strides = [1, 1]} : vector<16x32xf32> to vector<16x8xf32>
    %124 = vector.extract_strided_slice %25 {offsets = [0, 8], sizes = [16, 8], strides = [1, 1]} : vector<16x32xf32> to vector<16x8xf32>
    %125 = vector.extract_strided_slice %25 {offsets = [0, 16], sizes = [16, 8], strides = [1, 1]} : vector<16x32xf32> to vector<16x8xf32>
    %126 = vector.extract_strided_slice %25 {offsets = [0, 24], sizes = [16, 8], strides = [1, 1]} : vector<16x32xf32> to vector<16x8xf32>
    %127 = vector.shape_cast %123 : vector<16x8xf32> to vector<1x16x8xf32>
    %128 = vector.shape_cast %124 : vector<16x8xf32> to vector<1x16x8xf32>
    %129 = vector.shape_cast %125 : vector<16x8xf32> to vector<1x16x8xf32>
    %130 = vector.shape_cast %126 : vector<16x8xf32> to vector<1x16x8xf32>
    %131 = tpu.concatenate %127, %128, %129, %130 in 0 : vector<1x16x8xf32>, vector<1x16x8xf32>, vector<1x16x8xf32>, vector<1x16x8xf32> -> vector<4x16x8xf32>
    %132 = vector.extract_strided_slice %26 {offsets = [0, 0], sizes = [16, 8], strides = [1, 1]} : vector<16x32xf32> to vector<16x8xf32>
    %133 = vector.extract_strided_slice %26 {offsets = [0, 8], sizes = [16, 8], strides = [1, 1]} : vector<16x32xf32> to vector<16x8xf32>
    %134 = vector.extract_strided_slice %26 {offsets = [0, 16], sizes = [16, 8], strides = [1, 1]} : vector<16x32xf32> to vector<16x8xf32>
    %135 = vector.extract_strided_slice %26 {offsets = [0, 24], sizes = [16, 8], strides = [1, 1]} : vector<16x32xf32> to vector<16x8xf32>
    %136 = vector.shape_cast %132 : vector<16x8xf32> to vector<1x16x8xf32>
    %137 = vector.shape_cast %133 : vector<16x8xf32> to vector<1x16x8xf32>
    %138 = vector.shape_cast %134 : vector<16x8xf32> to vector<1x16x8xf32>
    %139 = vector.shape_cast %135 : vector<16x8xf32> to vector<1x16x8xf32>
    %140 = tpu.concatenate %136, %137, %138, %139 in 0 : vector<1x16x8xf32>, vector<1x16x8xf32>, vector<1x16x8xf32>, vector<1x16x8xf32> -> vector<4x16x8xf32>
    "tpu.trace_start"() <{level = 10 : i32, message = "hqd,hkd->hqk"}> : () -> ()
    %cst_44 = arith.constant dense<0.000000e+00> : vector<4x16x16xf32>
    %141 = tpu.matmul %122, %131, %cst_44 {dimension_numbers = #tpu.dot_dimension_numbers<[2], [2], [1], [1], [0, 0, 0, 1, 1, 1], [0], [0]>} : vector<4x16x8xf32>, vector<4x16x8xf32>, vector<4x16x16xf32> -> vector<4x16x16xf32>
    "tpu.trace_stop"() : () -> ()
    %142 = vector.shape_cast %109 : vector<16x16xf32> to vector<1x16x16xf32>
    %143 = vector.broadcast %142 : vector<1x16x16xf32> to vector<4x16x16xf32>
    %144 = arith.addf %141, %143 : vector<4x16x16xf32>
    %cst_45 = arith.constant dense<0xFF800000> : vector<4x16xf32>
    %145 = vector.multi_reduction <maximumf>, %144, %cst_45 [2] : vector<4x16x16xf32> to vector<4x16xf32>
    %146 = vector.shape_cast %145 : vector<4x16xf32> to vector<4x16x1xf32>
    %147 = vector.broadcast %146 : vector<4x16x1xf32> to vector<4x16x16xf32>
    %148 = arith.subf %144, %147 : vector<4x16x16xf32>
    %149 = math.exp %148 : vector<4x16x16xf32>
    %cst_46 = arith.constant dense<0.000000e+00> : vector<4x16xf32>
    %150 = vector.multi_reduction <add>, %149, %cst_46 [2] : vector<4x16x16xf32> to vector<4x16xf32>
    %151 = vector.shape_cast %150 : vector<4x16xf32> to vector<4x16x1xf32>
    %152 = tpu.reciprocal %151 {approx = true} : vector<4x16x1xf32> -> vector<4x16x1xf32>
    %153 = vector.broadcast %152 : vector<4x16x1xf32> to vector<4x16x16xf32>
    %154 = arith.mulf %149, %153 : vector<4x16x16xf32>
    "tpu.trace_start"() <{level = 10 : i32, message = "hqk,hkd->hqd"}> : () -> ()
    %cst_47 = arith.constant dense<0.000000e+00> : vector<4x16x8xf32>
    %155 = tpu.matmul %154, %140, %cst_47 {dimension_numbers = #tpu.dot_dimension_numbers<[2], [1], [1], [2], [0, 0, 0, 1, 1, 2], [0], [0]>} : vector<4x16x16xf32>, vector<4x16x8xf32>, vector<4x16x8xf32> -> vector<4x16x8xf32>
    "tpu.trace_stop"() : () -> ()
    %156 = vector.extract_strided_slice %155 {offsets = [0, 0, 0], sizes = [1, 16, 8], strides = [1, 1, 1]} : vector<4x16x8xf32> to vector<1x16x8xf32>
    %157 = vector.shape_cast %156 : vector<1x16x8xf32> to vector<16x8xf32>
    %158 = vector.extract_strided_slice %155 {offsets = [1, 0, 0], sizes = [1, 16, 8], strides = [1, 1, 1]} : vector<4x16x8xf32> to vector<1x16x8xf32>
    %159 = vector.shape_cast %158 : vector<1x16x8xf32> to vector<16x8xf32>
    %160 = vector.extract_strided_slice %155 {offsets = [2, 0, 0], sizes = [1, 16, 8], strides = [1, 1, 1]} : vector<4x16x8xf32> to vector<1x16x8xf32>
    %161 = vector.shape_cast %160 : vector<1x16x8xf32> to vector<16x8xf32>
    %162 = vector.extract_strided_slice %155 {offsets = [3, 0, 0], sizes = [1, 16, 8], strides = [1, 1, 1]} : vector<4x16x8xf32> to vector<1x16x8xf32>
    %163 = vector.shape_cast %162 : vector<1x16x8xf32> to vector<16x8xf32>
    %164 = tpu.concatenate %157, %159, %161, %163 in 1 : vector<16x8xf32>, vector<16x8xf32>, vector<16x8xf32>, vector<16x8xf32> -> vector<16x32xf32>
    %cst_48 = arith.constant dense<0.000000e+00> : vector<16x32xf32>
    %165 = tpu.matmul %164, %111, %cst_48 {dimension_numbers = #tpu.dot_dimension_numbers<[1], [0], [0], [1], [0, 0, 1, 1], [], []>} : vector<16x32xf32>, vector<32x32xf32>, vector<16x32xf32> -> vector<16x32xf32>
    %166 = vector.broadcast %113 : vector<1x32xf32> to vector<16x32xf32>
    %167 = arith.addf %165, %166 : vector<16x32xf32>
    %168 = arith.addf %167, %108 : vector<16x32xf32>
    %c2 = arith.constant 2 : index
    %169 = memref.load %arg16[%c2] : memref<6xf32, #tpu.memory_space<smem>>
    %c3 = arith.constant 3 : index
    %170 = memref.load %arg16[%c3] : memref<6xf32, #tpu.memory_space<smem>>
    %cst_49 = arith.constant dense<0.000000e+00> : vector<16xf32>
    %171 = vector.multi_reduction <add>, %168, %cst_49 [1] : vector<16x32xf32> to vector<16xf32>
    %172 = vector.shape_cast %171 : vector<16xf32> to vector<16x1xf32>
    %cst_50 = arith.constant 3.200000e+01 : f32
    %173 = vector.broadcast %cst_50 : f32 to vector<16x1xf32>
    %174 = arith.divf %172, %173 : vector<16x1xf32>
    %175 = vector.broadcast %174 : vector<16x1xf32> to vector<16x32xf32>
    %176 = arith.subf %168, %175 : vector<16x32xf32>
    %177 = arith.mulf %176, %176 : vector<16x32xf32>
    %cst_51 = arith.constant dense<0.000000e+00> : vector<16xf32>
    %178 = vector.multi_reduction <add>, %177, %cst_51 [1] : vector<16x32xf32> to vector<16xf32>
    %179 = vector.shape_cast %178 : vector<16xf32> to vector<16x1xf32>
    %cst_52 = arith.constant 0.0322580636 : f32
    %180 = vector.broadcast %cst_52 : f32 to vector<16x1xf32>
    %181 = arith.mulf %179, %180 : vector<16x1xf32>
    %182 = vector.broadcast %169 : f32 to vector<16x32xf32>
    %183 = arith.mulf %182, %176 : vector<16x32xf32>
    %cst_53 = arith.constant 9.99999997E-7 : f32
    %184 = vector.broadcast %cst_53 : f32 to vector<16x1xf32>
    %185 = arith.addf %181, %184 : vector<16x1xf32>
    %186 = math.rsqrt %185 : vector<16x1xf32>
    %187 = vector.broadcast %186 : vector<16x1xf32> to vector<16x32xf32>
    %188 = arith.mulf %183, %187 : vector<16x32xf32>
    %189 = vector.broadcast %170 : f32 to vector<16x32xf32>
    %190 = arith.addf %188, %189 : vector<16x32xf32>
    %c0_54 = arith.constant 0 : index
    %c0_55 = arith.constant 0 : index
    %191 = vector.load %arg12[%c0_54, %c0_55] : memref<32x64xf32, #tpu.memory_space<vmem>>, vector<32x64xf32>
    %c0_56 = arith.constant 0 : index
    %c0_57 = arith.constant 0 : index
    %192 = vector.load %arg13[%c0_56, %c0_57] : memref<1x64xf32, #tpu.memory_space<vmem>>, vector<1x64xf32>
    %cst_58 = arith.constant dense<0.000000e+00> : vector<16x64xf32>
    %193 = tpu.matmul %190, %191, %cst_58 {dimension_numbers = #tpu.dot_dimension_numbers<[1], [0], [0], [1], [0, 0, 1, 1], [], []>} : vector<16x32xf32>, vector<32x64xf32>, vector<16x64xf32> -> vector<16x64xf32>
    %194 = vector.broadcast %192 : vector<1x64xf32> to vector<16x64xf32>
    %195 = arith.addf %193, %194 : vector<16x64xf32>
    %cst_59 = arith.constant 0.000000e+00 : f32
    %196 = vector.broadcast %cst_59 : f32 to vector<16x64xf32>
    %197 = arith.maximumf %195, %196 : vector<16x64xf32>
    %c0_60 = arith.constant 0 : index
    %c0_61 = arith.constant 0 : index
    %198 = vector.load %arg14[%c0_60, %c0_61] : memref<64x32xf32, #tpu.memory_space<vmem>>, vector<64x32xf32>
    %c0_62 = arith.constant 0 : index
    %c0_63 = arith.constant 0 : index
    %199 = vector.load %arg15[%c0_62, %c0_63] : memref<1x32xf32, #tpu.memory_space<vmem>>, vector<1x32xf32>
    %cst_64 = arith.constant dense<0.000000e+00> : vector<16x32xf32>
    %200 = tpu.matmul %197, %198, %cst_64 {dimension_numbers = #tpu.dot_dimension_numbers<[1], [0], [0], [1], [0, 0, 1, 1], [], []>} : vector<16x64xf32>, vector<64x32xf32>, vector<16x32xf32> -> vector<16x32xf32>
    %201 = vector.broadcast %199 : vector<1x32xf32> to vector<16x32xf32>
    %202 = arith.addf %200, %201 : vector<16x32xf32>
    %203 = arith.addf %190, %202 : vector<16x32xf32>
    %c4 = arith.constant 4 : index
    %204 = memref.load %arg16[%c4] : memref<6xf32, #tpu.memory_space<smem>>
    %c5 = arith.constant 5 : index
    %205 = memref.load %arg16[%c5] : memref<6xf32, #tpu.memory_space<smem>>
    %cst_65 = arith.constant dense<0.000000e+00> : vector<16xf32>
    %206 = vector.multi_reduction <add>, %203, %cst_65 [1] : vector<16x32xf32> to vector<16xf32>
    %207 = vector.shape_cast %206 : vector<16xf32> to vector<16x1xf32>
    %cst_66 = arith.constant 3.200000e+01 : f32
    %208 = vector.broadcast %cst_66 : f32 to vector<16x1xf32>
    %209 = arith.divf %207, %208 : vector<16x1xf32>
    %210 = vector.broadcast %209 : vector<16x1xf32> to vector<16x32xf32>
    %211 = arith.subf %203, %210 : vector<16x32xf32>
    %212 = arith.mulf %211, %211 : vector<16x32xf32>
    %cst_67 = arith.constant dense<0.000000e+00> : vector<16xf32>
    %213 = vector.multi_reduction <add>, %212, %cst_67 [1] : vector<16x32xf32> to vector<16xf32>
    %214 = vector.shape_cast %213 : vector<16xf32> to vector<16x1xf32>
    %cst_68 = arith.constant 0.0322580636 : f32
    %215 = vector.broadcast %cst_68 : f32 to vector<16x1xf32>
    %216 = arith.mulf %214, %215 : vector<16x1xf32>
    %217 = vector.broadcast %204 : f32 to vector<16x32xf32>
    %218 = arith.mulf %217, %211 : vector<16x32xf32>
    %cst_69 = arith.constant 9.99999997E-7 : f32
    %219 = vector.broadcast %cst_69 : f32 to vector<16x1xf32>
    %220 = arith.addf %216, %219 : vector<16x1xf32>
    %221 = math.rsqrt %220 : vector<16x1xf32>
    %222 = vector.broadcast %221 : vector<16x1xf32> to vector<16x32xf32>
    %223 = arith.mulf %218, %222 : vector<16x32xf32>
    %224 = vector.broadcast %205 : f32 to vector<16x32xf32>
    %225 = arith.addf %223, %224 : vector<16x32xf32>
    %c0_70 = arith.constant 0 : index
    %c0_71 = arith.constant 0 : index
    %226 = vector.load %arg17[%c0_70, %c0_71] : memref<16x32xf32, #tpu.memory_space<vmem>>, vector<16x32xf32>
    tpu.vector_store %arg17[%c0_70, %c0_71], %225 {strides = array<i32>} : memref<16x32xf32, #tpu.memory_space<vmem>>, vector<16x32xf32>,
    return
  }
}

</mosaic_0001>

<llo_original>
// kernel: tpu_custom_call.1
$region0: #{tpu_custom_call.1}
  #allocation0 [shape = 'u32[]', space=smem, size = 0x4, offset = 0x4, fixed_abs, tag = 'smem constant byte address 0x4 - core index']
  #allocation1 [shape = 'u32[144,128]{1,0:T(1,128)}', space=vmem, size = 0x12000, scoped, tag = 'internal scratch']
  %s0 = inlined_call_operand.vmem [shape: s32[16,1], index: 0, kind: input, shape index: {}]
  %s1 = inlined_call_operand.vmem [shape: f32[50,32], index: 1, kind: input, shape index: {}]
  %s2 = inlined_call_operand.vmem [shape: f32[16,32], index: 2, kind: input, shape index: {}]
  %s3 = inlined_call_operand.hbm [shape: f32[16,32], index: 3, kind: input, shape index: {}]
  %s4 = inlined_call_operand.hbm [shape: f32[16,16], index: 4, kind: input, shape index: {}]
  %s5 = inlined_call_operand.hbm [shape: f32[16,16], index: 5, kind: input, shape index: {}]
  %s6 = inlined_call_operand.vmem [shape: f32[32,128], index: 6, kind: input, shape index: {}]
  %s7 = inlined_call_operand.vmem [shape: f32[1,128], index: 7, kind: input, shape index: {}]
  %s8 = inlined_call_operand.vmem [shape: f32[32,64], index: 8, kind: input, shape index: {}]
  %s9 = inlined_call_operand.vmem [shape: f32[1,64], index: 9, kind: input, shape index: {}]
  %s10 = inlined_call_operand.vmem [shape: f32[2,32,32], index: 10, kind: input, shape index: {}]
  %s11 = inlined_call_operand.vmem [shape: f32[2,1,32], index: 11, kind: input, shape index: {}]
  %s12 = inlined_call_operand.vmem [shape: f32[32,64], index: 12, kind: input, shape index: {}]
  %s13 = inlined_call_operand.vmem [shape: f32[1,64], index: 13, kind: input, shape index: {}]
  %s14 = inlined_call_operand.vmem [shape: f32[64,32], index: 14, kind: input, shape index: {}]
  %s15 = inlined_call_operand.vmem [shape: f32[1,32], index: 15, kind: input, shape index: {}]
  %s16 = inlined_call_operand.vmem [shape: f32[6], index: 16, kind: input, shape index: {}]
  %s17 = inlined_call_operand.hbm [shape: f32[16,32], index: 17, kind: output, shape index: {}]
  %s18 = sld [smem:[#allocation0]]
  $region94: #{tpu_custom_call.1} parent=0
    _
  %s20 = ssub.s32 1, %s18
  %s21 = scalar_select 0, %s20, %s18
  $region1: #{tpu_custom_call.1} parent=0
    #allocation2 [shape = 'u8[8192]{0}', space=vmem, size = 0x2000, scoped, tag = 'input window, operand 3, single buffered']
    #allocation3 [shape = 's32[1]{0}', space=sflag, size = 0x4, scoped, tag = 'scoped memory for tpu_custom_call.1']
    #allocation4 [shape = 's32[1]{0}', space=sflag, size = 0x4, scoped, tag = 'scoped memory for tpu_custom_call.1']
    #allocation5 [shape = 's32[1]{0}', space=sflag, size = 0x4, scoped, tag = 'scoped memory for tpu_custom_call.1']
    #allocation6 [shape = 'u8[8192]{0}', space=vmem, size = 0x2000, scoped, tag = 'input window, operand 4, single buffered']
    #allocation7 [shape = 's32[1]{0}', space=sflag, size = 0x4, scoped, tag = 'scoped memory for tpu_custom_call.1']
    #allocation8 [shape = 'u8[8192]{0}', space=vmem, size = 0x2000, scoped, tag = 'input window, operand 5, single buffered']
    #allocation9 [shape = 'u8[512]{0}', space=smem, size = 0x200, scoped, tag = 'input window, operand 16, single buffered']
    #allocation10 [shape = 'u8[8192]{0}', space=vmem, size = 0x2000, scoped, tag = 'output window, operand 0, single buffered']
    %22 = vsyncpa [#allocation3], 0
    %23 = vsyncpa [#allocation7], 0
    %24 = vsyncpa [#allocation5], 0
    %25 = vsyncpa [#allocation4], 0
    // Predicated region
    $region2: #{tpu_custom_call.1} parent=1 // pred_check
      _
    $region3: #{tpu_custom_call.1} parent=1 // pred_check_branch
      %27 = sbr.rel (0) target = $region5
    $region4: #{tpu_custom_call.1} parent=1 // pred_region
      _
    $region5: #{tpu_custom_call.1} parent=1 // pred_fallthru
      _
    // Predicated region
    $region6: #{tpu_custom_call.1} parent=1 // pred_check
      _
    $region7: #{tpu_custom_call.1} parent=1 // pred_check_branch
      %29 = sbr.rel (0) target = $region9
    $region8: #{tpu_custom_call.1} parent=1 // pred_region
      _
    $region9: #{tpu_custom_call.1} parent=1 // pred_fallthru
      _
    // Predicated region
    $region10: #{tpu_custom_call.1} parent=1 // pred_check
      _
    $region11: #{tpu_custom_call.1} parent=1 // pred_check_branch
      %31 = sbr.rel (0) target = $region13
    $region12: #{tpu_custom_call.1} parent=1 // pred_region
      _
    $region13: #{tpu_custom_call.1} parent=1 // pred_fallthru
      _
    // Predicated region
    $region14: #{tpu_custom_call.1} parent=1 // pred_check
      _
    $region15: #{tpu_custom_call.1} parent=1 // pred_check_branch
      %33 = sbr.rel (0) target = $region17
    $region16: #{tpu_custom_call.1} parent=1 // pred_region
      %s35 = ssub.s32 256, 256
      %36 = vsyncadd [#allocation3], %s35
      %s37 = sshll.u32 [#allocation2], 4
      %s38 = int_to_ptr.vmem [resolvable:$true] %s37
      %43 = dma.hbm_to_vmem [thread:$0]  %s3, 256, %s38, [#allocation3], 128, 128, 8
    $region17: #{tpu_custom_call.1} parent=1 // pred_fallthru
      _
    // Predicated region
    $region18: #{tpu_custom_call.1} parent=1 // pred_check
      _
    $region19: #{tpu_custom_call.1} parent=1 // pred_check_branch
      %45 = sbr.rel (0) target = $region21
    $region20: #{tpu_custom_call.1} parent=1 // pred_region
      %s47 = ssub.s32 256, 256
      %48 = vsyncadd [#allocation7], %s47
      %s49 = sshll.u32 [#allocation6], 4
      %s50 = int_to_ptr.vmem [resolvable:$true] %s49
      %55 = dma.hbm_to_vmem [thread:$0]  %s4, 256, %s50, [#allocation7], 128, 128, 8
    $region21: #{tpu_custom_call.1} parent=1 // pred_fallthru
      _
    // Predicated region
    $region22: #{tpu_custom_call.1} parent=1 // pred_check
      _
    $region23: #{tpu_custom_call.1} parent=1 // pred_check_branch
      %57 = sbr.rel (0) target = $region25
    $region24: #{tpu_custom_call.1} parent=1 // pred_region
      %s59 = ssub.s32 256, 256
      %60 = vsyncadd [#allocation7], %s59
      %s61 = sshll.u32 [#allocation8], 4
      %s62 = int_to_ptr.vmem [resolvable:$true] %s61
      %67 = dma.hbm_to_vmem [thread:$0]  %s5, 256, %s62, [#allocation7], 128, 128, 8
    $region25: #{tpu_custom_call.1} parent=1 // pred_fallthru
      _
    // Predicated region
    $region26: #{tpu_custom_call.1} parent=1 // pred_check
      _
    $region27: #{tpu_custom_call.1} parent=1 // pred_check_branch
      %69 = sbr.rel (0) target = $region29
    $region28: #{tpu_custom_call.1} parent=1 // pred_region
      _
    $region29: #{tpu_custom_call.1} parent=1 // pred_fallthru
      _
    // Predicated region
    $region30: #{tpu_custom_call.1} parent=1 // pred_check
      _
    $region31: #{tpu_custom_call.1} parent=1 // pred_check_branch
      %71 = sbr.rel (0) target = $region33
    $region32: #{tpu_custom_call.1} parent=1 // pred_region
      _
    $region33: #{tpu_custom_call.1} parent=1 // pred_fallthru
      _
    // Predicated region
    $region34: #{tpu_custom_call.1} parent=1 // pred_check
      _
    $region35: #{tpu_custom_call.1} parent=1 // pred_check_branch
      %73 = sbr.rel (0) target = $region37
    $region36: #{tpu_custom_call.1} parent=1 // pred_region
      _
    $region37: #{tpu_custom_call.1} parent=1 // pred_fallthru
      _
    // Predicated region
    $region38: #{tpu_custom_call.1} parent=1 // pred_check
      _
    $region39: #{tpu_custom_call.1} parent=1 // pred_check_branch
      %75 = sbr.rel (0) target = $region41
    $region40: #{tpu_custom_call.1} parent=1 // pred_region
      _
    $region41: #{tpu_custom_call.1} parent=1 // pred_fallthru
      _
    // Predicated region
    $region42: #{tpu_custom_call.1} parent=1 // pred_check
      _
    $region43: #{tpu_custom_call.1} parent=1 // pred_check_branch
      %77 = sbr.rel (0) target = $region45
    $region44: #{tpu_custom_call.1} parent=1 // pred_region
      _
    $region45: #{tpu_custom_call.1} parent=1 // pred_fallthru
      _
    // Predicated region
    $region46: #{tpu_custom_call.1} parent=1 // pred_check
      _
    $region47: #{tpu_custom_call.1} parent=1 // pred_check_branch
      %79 = sbr.rel (0) target = $region49
    $region48: #{tpu_custom_call.1} parent=1 // pred_region
      _
    $region49: #{tpu_custom_call.1} parent=1 // pred_fallthru
      _
    // Predicated region
    $region50: #{tpu_custom_call.1} parent=1 // pred_check
      _
    $region51: #{tpu_custom_call.1} parent=1 // pred_check_branch
      %81 = sbr.rel (0) target = $region53
    $region52: #{tpu_custom_call.1} parent=1 // pred_region
      _
    $region53: #{tpu_custom_call.1} parent=1 // pred_fallthru
      _
    // Predicated region
    $region54: #{tpu_custom_call.1} parent=1 // pred_check
      _
    $region55: #{tpu_custom_call.1} parent=1 // pred_check_branch
      %83 = sbr.rel (0) target = $region57
    $region56: #{tpu_custom_call.1} parent=1 // pred_region
      _
    $region57: #{tpu_custom_call.1} parent=1 // pred_fallthru
      _
    // Predicated region
    $region58: #{tpu_custom_call.1} parent=1 // pred_check
      _
    $region59: #{tpu_custom_call.1} parent=1 // pred_check_branch
      %85 = sbr.rel (0) target = $region61
    $region60: #{tpu_custom_call.1} parent=1 // pred_region
      _
    $region61: #{tpu_custom_call.1} parent=1 // pred_fallthru
      _
    // Predicated region
    $region62: #{tpu_custom_call.1} parent=1 // pred_check
      _
    $region63: #{tpu_custom_call.1} parent=1 // pred_check_branch
      %87 = sbr.rel (0) target = $region65
    $region64: #{tpu_custom_call.1} parent=1 // pred_region
      _
    $region65: #{tpu_custom_call.1} parent=1 // pred_fallthru
      _
    // Predicated region
    $region66: #{tpu_custom_call.1} parent=1 // pred_check
      _
    $region67: #{tpu_custom_call.1} parent=1 // pred_check_branch
      %89 = sbr.rel (0) target = $region69
    $region68: #{tpu_custom_call.1} parent=1 // pred_region
      %s91 = ssub.s32 16, 16
      %92 = vsyncadd [#allocation5], %s91
      %s94 = sshll.u32 %s16, 4
      %s95 = int_to_ptr.vmem [resolvable:$true] %s94
      %97 = dma.vmem_to_smem %s95, 16, [#allocation9], [#allocation5]
    $region69: #{tpu_custom_call.1} parent=1 // pred_fallthru
      _
    // Predicated region
    $region70: #{tpu_custom_call.1} parent=1 // pred_check
      _
    $region71: #{tpu_custom_call.1} parent=1 // pred_check_branch
      %99 = sbr.rel (0) target = $region73
    $region72: #{tpu_custom_call.1} parent=1 // pred_region
      %100 = dma.done [#allocation3], 256
    $region73: #{tpu_custom_call.1} parent=1 // pred_fallthru
      _
    // Predicated region
    $region74: #{tpu_custom_call.1} parent=1 // pred_check
      _
    $region75: #{tpu_custom_call.1} parent=1 // pred_check_branch
      %102 = sbr.rel (0) target = $region77
    $region76: #{tpu_custom_call.1} parent=1 // pred_region
      %103 = dma.done [#allocation7], 256
    $region77: #{tpu_custom_call.1} parent=1 // pred_fallthru
      _
    // Predicated region
    $region78: #{tpu_custom_call.1} parent=1 // pred_check
      _
    $region79: #{tpu_custom_call.1} parent=1 // pred_check_branch
      %105 = sbr.rel (0) target = $region81
    $region80: #{tpu_custom_call.1} parent=1 // pred_region
      %106 = dma.done [#allocation7], 256
    $region81: #{tpu_custom_call.1} parent=1 // pred_fallthru
      _
    // Predicated region
    $region82: #{tpu_custom_call.1} parent=1 // pred_check
      _
    $region83: #{tpu_custom_call.1} parent=1 // pred_check_branch
      %108 = sbr.rel (0) target = $region85
    $region84: #{tpu_custom_call.1} parent=1 // pred_region
      %109 = dma.done [#allocation5], 16
    $region85: #{tpu_custom_call.1} parent=1 // pred_fallthru
      _
    %110 = sfence
    %v111 = vld [vmem:[%s0] sm:$0xff]
    %v112 = vld [vmem:[%s0 + $0x8] sm:$0xff]
    %v113 = vlaneseq
    %v114 = vand.u32 %v113, 127
    %115 = vset.pattern.permute.xlu0 0
    %116 = vperm.xlu0 %115, %v111
    %v117 = vpop.permute.xlu0 %116
    %118 = vset.pattern.permute.xlu0 0
    %119 = vperm.xlu0 %118, %v112
    %v120 = vpop.permute.xlu0 %119
    %vm121 = vcmp.eq.s32.totalorder %v114, %v117
    %vm122 = vcmp.eq.s32.totalorder %v114, %v120
    %v123 = vsel %vm121, 1, 0
    %v124 = vsel %vm122, 1, 0
    %v125 = vcvt.s32.f32 %v123
    %v126 = vcvt.s32.f32 %v124
    %v127 = vld [vmem:[%s1] sm:$0xff]
    %v128 = vld [vmem:[%s1 + $0x8] sm:$0xff]
    %v129 = vld [vmem:[%s1 + $0x10] sm:$0xff]
    %v130 = vld [vmem:[%s1 + $0x18] sm:$0xff]
    %v131 = vld [vmem:[%s1 + $0x20] sm:$0xff]
    %v132 = vld [vmem:[%s1 + $0x28] sm:$0xff]
    %v133 = vld [vmem:[%s1 + $0x30] sm:$0x3]
    %v134 = vld [vmem:[%s2] sm:$0xff]
    %v135 = vld [vmem:[%s2 + $0x8] sm:$0xff]
    %vm136 = vcmask 408576
    %v138 = vsel %vm136, %v125, 0
    %v141 = vsel %vm136, %v126, 0
    %vm143 = vcmask 1041408
    %v145 = vsel %vm143, %v133, 0
    %147 = vmatprep.subr.mxu0 0.0
    %148 = vmatpush1.msra.mxu0 %v127
    %149 = vmatprep.subr.mxu0 0.0
    %150 = vmatpush1.msra.mxu0 %v128
    %151 = vmatprep.subr.mxu0 0.0
    %152 = vmatpush1.msra.mxu0 %v129
    %153 = vmatprep.subr.mxu0 0.0
    %154 = vmatpush1.msra.mxu0 %v130
    %155 = vmatprep.subr.mxu0 0.0
    %156 = vmatpush1.msra.mxu0 %v131
    %157 = vmatprep.subr.mxu0 0.0
    %158 = vmatpush1.msra.mxu0 %v132
    %159 = vmatprep.subr.mxu0 0.0
    %160 = vmatpush1.msra.mxu0 %v145
    %161 = vmatprep.subr.mxu0 0.0
    %162 = vmatpush1.msra.mxu0 0.0
    %163 = vmatprep.subr.mxu0 0.0
    %164 = vmatpush1.msra.mxu0 0.0
    %165 = vmatprep.subr.mxu0 0.0
    %166 = vmatpush1.msra.mxu0 0.0
    %167 = vmatprep.subr.mxu0 0.0
    %168 = vmatpush1.msra.mxu0 0.0
    %169 = vmatprep.subr.mxu0 0.0
    %170 = vmatpush1.msra.mxu0 0.0
    %171 = vmatprep.subr.mxu0 0.0
    %172 = vmatpush1.msra.mxu0 0.0
    %173 = vmatprep.subr.mxu0 0.0
    %174 = vmatpush1.msra.mxu0 0.0
    %175 = vmatprep.subr.mxu0 0.0
    %176 = vmatpush1.msra.mxu0 0.0
    %177 = vmatprep.subr.mxu0 0.0
    %178 = vmatpush1.msra.mxu0 0.0
    %179 = vmatprep.subr.mxu0 0.0
    %180 = vmatpush1.msra.mxu0 0.0
    %181 = vmatprep.subr.mxu0 0.0
    %182 = vmatpush1.msra.mxu0 0.0
    %183 = vmatprep.subr.mxu0 0.0
    %184 = vmatpush1.msra.mxu0 0.0
    %185 = vmatprep.subr.mxu0 0.0
    %186 = vmatpush1.msra.mxu0 0.0
    %187 = vmatprep.subr.mxu0 0.0
    %188 = vmatpush1.msra.mxu0 0.0
    %189 = vmatprep.subr.mxu0 0.0
    %190 = vmatpush1.msra.mxu0 0.0
    %191 = vmatprep.subr.mxu0 0.0
    %192 = vmatpush1.msra.mxu0 0.0
    %193 = vmatprep.subr.mxu0 0.0
    %194 = vmatpush1.msra.mxu0 0.0
    %195 = vmatprep.subr.mxu0 0.0
    %196 = vmatpush1.msra.mxu0 0.0
    %197 = vmatprep.subr.mxu0 0.0
    %198 = vmatpush1.msra.mxu0 0.0
    %199 = vmatprep.subr.mxu0 0.0
    %200 = vmatpush1.msra.mxu0 0.0
    %201 = vmatprep.subr.mxu0 0.0
    %202 = vmatpush1.msra.mxu0 0.0
    %203 = vmatprep.subr.mxu0 0.0
    %204 = vmatpush1.msra.mxu0 0.0
    %205 = vmatprep.subr.mxu0 0.0
    %206 = vmatpush1.msra.mxu0 0.0
    %207 = vmatprep.subr.mxu0 0.0
    %208 = vmatpush1.msra.mxu0 0.0
    %209 = vmatprep.subr.mxu0 0.0
    %210 = vmatpush1.msra.mxu0 0.0
    %211 = vmatprep.mubr.f32.mxu0 0.0
    %212 = vmatmul.mubr.f32.gmra.mrb[0].mxu0 %v138
    %v213 = vpop.f32.mrb[0].mxu0
    %v214 = vadd.f32 %v134, %v213
    %v215 = vpop.f32.mrb[0].mxu0
    %216 = vmatprep.mubr.f32.mxu0 0.0
    %217 = vmatmul.mubr.f32.gmra.mrb[0].mxu0 %v141
    %v218 = vpop.f32.mrb[0].mxu0
    %v219 = vadd.f32 %v135, %v218
    %v220 = vpop.f32.mrb[0].mxu0
    %221 = vdwg.mxu0
    %v222 = vld [vmem:[#allocation2] sm:$0xff]
    %v223 = vld [vmem:[#allocation2 + $0x8] sm:$0xff]
    %v224 = vld [vmem:[%s6] sm:$0xff]
    %v225 = vld [vmem:[%s6 + $0x8] sm:$0xff]
    %v226 = vld [vmem:[%s6 + $0x10] sm:$0xff]
    %v227 = vld [vmem:[%s6 + $0x18] sm:$0xff]
    %v228 = vld [vmem:[%s7] sm:$0x1]
    %v230 = vlaneseq
    %v231 = vshrl.u32 %v230, 7
    %v232 = vsub.s32 0, %v231
    %v233 = vrot.slane %v228, %v232
    %vm235 = vcmask 261120
    %v237 = vsel %vm235, %v214, 0
    %v240 = vsel %vm235, %v219, 0
    %242 = vmatprep.subr.mxu0 0.0
    %243 = vmatpush1.msra.mxu0 %v224
    %244 = vmatprep.subr.mxu0 0.0
    %245 = vmatpush1.msra.mxu0 %v225
    %246 = vmatprep.subr.mxu0 0.0
    %247 = vmatpush1.msra.mxu0 %v226
    %248 = vmatprep.subr.mxu0 0.0
    %249 = vmatpush1.msra.mxu0 %v227
    %250 = vmatprep.subr.mxu0 0.0
    %251 = vmatpush1.msra.mxu0 0.0
    %252 = vmatprep.subr.mxu0 0.0
    %253 = vmatpush1.msra.mxu0 0.0
    %254 = vmatprep.subr.mxu0 0.0
    %255 = vmatpush1.msra.mxu0 0.0
    %256 = vmatprep.subr.mxu0 0.0
    %257 = vmatpush1.msra.mxu0 0.0
    %258 = vmatprep.subr.mxu0 0.0
    %259 = vmatpush1.msra.mxu0 0.0
    %260 = vmatprep.subr.mxu0 0.0
    %261 = vmatpush1.msra.mxu0 0.0
    %262 = vmatprep.subr.mxu0 0.0
    %263 = vmatpush1.msra.mxu0 0.0
    %264 = vmatprep.subr.mxu0 0.0
    %265 = vmatpush1.msra.mxu0 0.0
    %266 = vmatprep.subr.mxu0 0.0
    %267 = vmatpush1.msra.mxu0 0.0
    %268 = vmatprep.subr.mxu0 0.0
    %269 = vmatpush1.msra.mxu0 0.0
    %270 = vmatprep.subr.mxu0 0.0
    %271 = vmatpush1.msra.mxu0 0.0
    %272 = vmatprep.subr.mxu0 0.0
    %273 = vmatpush1.msra.mxu0 0.0
    %274 = vmatprep.subr.mxu0 0.0
    %275 = vmatpush1.msra.mxu0 0.0
    %276 = vmatprep.subr.mxu0 0.0
    %277 = vmatpush1.msra.mxu0 0.0
    %278 = vmatprep.subr.mxu0 0.0
    %279 = vmatpush1.msra.mxu0 0.0
    %280 = vmatprep.subr.mxu0 0.0
    %281 = vmatpush1.msra.mxu0 0.0
    %282 = vmatprep.subr.mxu0 0.0
    %283 = vmatpush1.msra.mxu0 0.0
    %284 = vmatprep.subr.mxu0 0.0
    %285 = vmatpush1.msra.mxu0 0.0
    %286 = vmatprep.subr.mxu0 0.0
    %287 = vmatpush1.msra.mxu0 0.0
    %288 = vmatprep.subr.mxu0 0.0
    %289 = vmatpush1.msra.mxu0 0.0
    %290 = vmatprep.subr.mxu0 0.0
    %291 = vmatpush1.msra.mxu0 0.0
    %292 = vmatprep.subr.mxu0 0.0
    %293 = vmatpush1.msra.mxu0 0.0
    %294 = vmatprep.subr.mxu0 0.0
    %295 = vmatpush1.msra.mxu0 0.0
    %296 = vmatprep.subr.mxu0 0.0
    %297 = vmatpush1.msra.mxu0 0.0
    %298 = vmatprep.subr.mxu0 0.0
    %299 = vmatpush1.msra.mxu0 0.0
    %300 = vmatprep.subr.mxu0 0.0
    %301 = vmatpush1.msra.mxu0 0.0
    %302 = vmatprep.subr.mxu0 0.0
    %303 = vmatpush1.msra.mxu0 0.0
    %304 = vmatprep.subr.mxu0 0.0
    %305 = vmatpush1.msra.mxu0 0.0
    %306 = vmatprep.mubr.f32.mxu0 0.0
    %307 = vmatmul.mubr.f32.gmra.mrb[0].mxu0 %v237
    %v308 = vpop.f32.mrb[0].mxu0
    %v309 = vadd.f32 %v233, %v308
    %v310 = vpop.f32.mrb[0].mxu0
    %311 = vmatprep.mubr.f32.mxu0 0.0
    %312 = vmatmul.mubr.f32.gmra.mrb[0].mxu0 %v240
    %v313 = vpop.f32.mrb[0].mxu0
    %v314 = vadd.f32 %v233, %v313
    %v315 = vpop.f32.mrb[0].mxu0
    %316 = vdwg.mxu0
    %v317 = vld [vmem:[%s8] sm:$0xff]
    %v318 = vld [vmem:[%s8 + $0x8] sm:$0xff]
    %v319 = vld [vmem:[%s8 + $0x10] sm:$0xff]
    %v320 = vld [vmem:[%s8 + $0x18] sm:$0xff]
    %v321 = vld [vmem:[%s9] sm:$0x1]
    %v323 = vlaneseq
    %v324 = vshrl.u32 %v323, 7
    %v325 = vsub.s32 0, %v324
    %v326 = vrot.slane %v321, %v325
    %v329 = vsel %vm235, %v222, 0
    %v332 = vsel %vm235, %v223, 0
    %334 = vmatprep.subr.mxu0 0.0
    %335 = vmatpush1.msra.mxu0 %v317
    %336 = vmatprep.subr.mxu0 0.0
    %337 = vmatpush1.msra.mxu0 %v318
    %338 = vmatprep.subr.mxu0 0.0
    %339 = vmatpush1.msra.mxu0 %v319
    %340 = vmatprep.subr.mxu0 0.0
    %341 = vmatpush1.msra.mxu0 %v320
    %342 = vmatprep.subr.mxu0 0.0
    %343 = vmatpush1.msra.mxu0 0.0
    %344 = vmatprep.subr.mxu0 0.0
    %345 = vmatpush1.msra.mxu0 0.0
    %346 = vmatprep.subr.mxu0 0.0
    %347 = vmatpush1.msra.mxu0 0.0
    %348 = vmatprep.subr.mxu0 0.0
    %349 = vmatpush1.msra.mxu0 0.0
    %350 = vmatprep.subr.mxu0 0.0
    %351 = vmatpush1.msra.mxu0 0.0
    %352 = vmatprep.subr.mxu0 0.0
    %353 = vmatpush1.msra.mxu0 0.0
    %354 = vmatprep.subr.mxu0 0.0
    %355 = vmatpush1.msra.mxu0 0.0
    %356 = vmatprep.subr.mxu0 0.0
    %357 = vmatpush1.msra.mxu0 0.0
    %358 = vmatprep.subr.mxu0 0.0
    %359 = vmatpush1.msra.mxu0 0.0
    %360 = vmatprep.subr.mxu0 0.0
    %361 = vmatpush1.msra.mxu0 0.0
    %362 = vmatprep.subr.mxu0 0.0
    %363 = vmatpush1.msra.mxu0 0.0
    %364 = vmatprep.subr.mxu0 0.0
    %365 = vmatpush1.msra.mxu0 0.0
    %366 = vmatprep.subr.mxu0 0.0
    %367 = vmatpush1.msra.mxu0 0.0
    %368 = vmatprep.subr.mxu0 0.0
    %369 = vmatpush1.msra.mxu0 0.0
    %370 = vmatprep.subr.mxu0 0.0
    %371 = vmatpush1.msra.mxu0 0.0
    %372 = vmatprep.subr.mxu0 0.0
    %373 = vmatpush1.msra.mxu0 0.0
    %374 = vmatprep.subr.mxu0 0.0
    %375 = vmatpush1.msra.mxu0 0.0
    %376 = vmatprep.subr.mxu0 0.0
    %377 = vmatpush1.msra.mxu0 0.0
    %378 = vmatprep.subr.mxu0 0.0
    %379 = vmatpush1.msra.mxu0 0.0
    %380 = vmatprep.subr.mxu0 0.0
    %381 = vmatpush1.msra.mxu0 0.0
    %382 = vmatprep.subr.mxu0 0.0
    %383 = vmatpush1.msra.mxu0 0.0
    %384 = vmatprep.subr.mxu0 0.0
    %385 = vmatpush1.msra.mxu0 0.0
    %386 = vmatprep.subr.mxu0 0.0
    %387 = vmatpush1.msra.mxu0 0.0
    %388 = vmatprep.subr.mxu0 0.0
    %389 = vmatpush1.msra.mxu0 0.0
    %390 = vmatprep.subr.mxu0 0.0
    %391 = vmatpush1.msra.mxu0 0.0
    %392 = vmatprep.subr.mxu0 0.0
    %393 = vmatpush1.msra.mxu0 0.0
    %394 = vmatprep.subr.mxu0 0.0
    %395 = vmatpush1.msra.mxu0 0.0
    %396 = vmatprep.subr.mxu0 0.0
    %397 = vmatpush1.msra.mxu0 0.0
    %398 = vmatprep.mubr.f32.mxu0 0.0
    %399 = vmatmul.mubr.f32.gmra.mrb[0].mxu0 %v329
    %v400 = vpop.f32.mrb[0].mxu0
    %v401 = vadd.f32 %v326, %v400
    %v402 = vpop.f32.mrb[0].mxu0
    %403 = vmatprep.mubr.f32.mxu0 0.0
    %404 = vmatmul.mubr.f32.gmra.mrb[0].mxu0 %v332
    %v405 = vpop.f32.mrb[0].mxu0
    %v406 = vadd.f32 %v326, %v405
    %v407 = vpop.f32.mrb[0].mxu0
    %408 = vdwg.mxu0
    %v409 = vld [vmem:[#allocation6] sm:$0xff]
    %v410 = vld [vmem:[#allocation6 + $0x8] sm:$0xff]
    %v411 = vld [vmem:[%s10] sm:$0xff]
    %v412 = vld [vmem:[%s10 + $0x8] sm:$0xff]
    %v413 = vld [vmem:[%s10 + $0x10] sm:$0xff]
    %v414 = vld [vmem:[%s10 + $0x18] sm:$0xff]
    %v415 = vld [vmem:[%s11] sm:$0x1]
    %418 = vrot.lane.b32.xlu0 %v309, 120
    %v419 = vpop.permute.xlu0 %418
    %420 = vrot.lane.b32.xlu0 %v314, 120
    %v421 = vpop.permute.xlu0 %420
    %422 = vrot.lane.b32.xlu0 %v309, 112
    %v423 = vpop.permute.xlu0 %422
    %424 = vrot.lane.b32.xlu0 %v314, 112
    %v425 = vpop.permute.xlu0 %424
    %426 = vrot.lane.b32.xlu0 %v309, 104
    %v427 = vpop.permute.xlu0 %426
    %428 = vrot.lane.b32.xlu0 %v314, 104
    %v429 = vpop.permute.xlu0 %428
    %430 = vrot.lane.b32.xlu0 %v309, 96
    %v431 = vpop.permute.xlu0 %430
    %432 = vrot.lane.b32.xlu0 %v314, 96
    %v433 = vpop.permute.xlu0 %432
    %vm434 = vcmask 64512
    %v435 = vsel %vm434, %v309, 0
    %v437 = vsel %vm434, %v314, 0
    %v439 = vsel %vm434, %v431, 0
    %v441 = vsel %vm434, %v433, 0
    %443 = vmatprep.subr.mxu0 0.0
    %444 = vmatpush1.xpose.msra.mxu0 %v439
    %445 = vmatprep.subr.mxu0 0.0
    %446 = vmatpush1.xpose.msra.mxu0 %v441
    %447 = vmatprep.subr.mxu0 0.0
    %448 = vmatpush1.xpose.msra.mxu0 0.0
    %449 = vmatprep.subr.mxu0 0.0
    %450 = vmatpush1.xpose.msra.mxu0 0.0
    %451 = vmatprep.subr.mxu0 0.0
    %452 = vmatpush1.xpose.msra.mxu0 0.0
    %453 = vmatprep.subr.mxu0 0.0
    %454 = vmatpush1.xpose.msra.mxu0 0.0
    %455 = vmatprep.subr.mxu0 0.0
    %456 = vmatpush1.xpose.msra.mxu0 0.0
    %457 = vmatprep.subr.mxu0 0.0
    %458 = vmatpush1.xpose.msra.mxu0 0.0
    %459 = vmatprep.subr.mxu0 0.0
    %460 = vmatpush1.xpose.msra.mxu0 0.0
    %461 = vmatprep.subr.mxu0 0.0
    %462 = vmatpush1.xpose.msra.mxu0 0.0
    %463 = vmatprep.subr.mxu0 0.0
    %464 = vmatpush1.xpose.msra.mxu0 0.0
    %465 = vmatprep.subr.mxu0 0.0
    %466 = vmatpush1.xpose.msra.mxu0 0.0
    %467 = vmatprep.subr.mxu0 0.0
    %468 = vmatpush1.xpose.msra.mxu0 0.0
    %469 = vmatprep.subr.mxu0 0.0
    %470 = vmatpush1.xpose.msra.mxu0 0.0
    %471 = vmatprep.subr.mxu0 0.0
    %472 = vmatpush1.xpose.msra.mxu0 0.0
    %473 = vmatprep.subr.mxu0 0.0
    %474 = vmatpush1.xpose.msra.mxu0 0.0
    %475 = vmatprep.subr.mxu0 0.0
    %476 = vmatpush1.xpose.msra.mxu0 0.0
    %477 = vmatprep.subr.mxu0 0.0
    %478 = vmatpush1.xpose.msra.mxu0 0.0
    %479 = vmatprep.subr.mxu0 0.0
    %480 = vmatpush1.xpose.msra.mxu0 0.0
    %481 = vmatprep.subr.mxu0 0.0
    %482 = vmatpush1.xpose.msra.mxu0 0.0
    %483 = vmatprep.subr.mxu0 0.0
    %484 = vmatpush1.xpose.msra.mxu0 0.0
    %485 = vmatprep.subr.mxu0 0.0
    %486 = vmatpush1.xpose.msra.mxu0 0.0
    %487 = vmatprep.subr.mxu0 0.0
    %488 = vmatpush1.xpose.msra.mxu0 0.0
    %489 = vmatprep.subr.mxu0 0.0
    %490 = vmatpush1.xpose.msra.mxu0 0.0
    %491 = vmatprep.subr.mxu0 0.0
    %492 = vmatpush1.xpose.msra.mxu0 0.0
    %493 = vmatprep.subr.mxu0 0.0
    %494 = vmatpush1.xpose.msra.mxu0 0.0
    %495 = vmatprep.subr.mxu0 0.0
    %496 = vmatpush1.xpose.msra.mxu0 0.0
    %497 = vmatprep.subr.mxu0 0.0
    %498 = vmatpush1.xpose.msra.mxu0 0.0
    %499 = vmatprep.subr.mxu0 0.0
    %500 = vmatpush1.xpose.msra.mxu0 0.0
    %501 = vmatprep.subr.mxu0 0.0
    %502 = vmatpush1.xpose.msra.mxu0 0.0
    %503 = vmatprep.subr.mxu0 0.0
    %504 = vmatpush1.xpose.msra.mxu0 0.0
    %505 = vmatprep.subr.mxu0 0.0
    %506 = vmatpush1.xpose.msra.mxu0 0.0
    %507 = vmatprep.mubr.f32.mxu0 0.0
    %508 = vmatmul.mubr.f32.gmra.mrb[0].mxu0 %v435
    %v509 = vpop.f32.mrb[0].mxu0
    %v510 = vadd.f32 %v409, %v509
    %v511 = vpop.f32.mrb[0].mxu0
    %512 = vmatprep.mubr.f32.mxu0 0.0
    %513 = vmatmul.mubr.f32.gmra.mrb[0].mxu0 %v437
    %v514 = vpop.f32.mrb[0].mxu0
    %v515 = vadd.f32 %v410, %v514
    %v516 = vpop.f32.mrb[0].mxu0
    %517 = vdwg.mxu0
    %518 = vrot.lane.b32.xlu0 %v419, 96
    %v519 = vpop.permute.xlu0 %518
    %520 = vrot.lane.b32.xlu0 %v421, 96
    %v521 = vpop.permute.xlu0 %520
    %v522 = vsel %vm434, %v419, 0
    %v524 = vsel %vm434, %v421, 0
    %v526 = vsel %vm434, %v519, 0
    %v528 = vsel %vm434, %v521, 0
    %530 = vmatprep.subr.mxu0 0.0
    %531 = vmatpush1.xpose.msra.mxu0 %v526
    %532 = vmatprep.subr.mxu0 0.0
    %533 = vmatpush1.xpose.msra.mxu0 %v528
    %534 = vmatprep.subr.mxu0 0.0
    %535 = vmatpush1.xpose.msra.mxu0 0.0
    %536 = vmatprep.subr.mxu0 0.0
    %537 = vmatpush1.xpose.msra.mxu0 0.0
    %538 = vmatprep.subr.mxu0 0.0
    %539 = vmatpush1.xpose.msra.mxu0 0.0
    %540 = vmatprep.subr.mxu0 0.0
    %541 = vmatpush1.xpose.msra.mxu0 0.0
    %542 = vmatprep.subr.mxu0 0.0
    %543 = vmatpush1.xpose.msra.mxu0 0.0
    %544 = vmatprep.subr.mxu0 0.0
    %545 = vmatpush1.xpose.msra.mxu0 0.0
    %546 = vmatprep.subr.mxu0 0.0
    %547 = vmatpush1.xpose.msra.mxu0 0.0
    %548 = vmatprep.subr.mxu0 0.0
    %549 = vmatpush1.xpose.msra.mxu0 0.0
    %550 = vmatprep.subr.mxu0 0.0
    %551 = vmatpush1.xpose.msra.mxu0 0.0
    %552 = vmatprep.subr.mxu0 0.0
    %553 = vmatpush1.xpose.msra.mxu0 0.0
    %554 = vmatprep.subr.mxu0 0.0
    %555 = vmatpush1.xpose.msra.mxu0 0.0
    %556 = vmatprep.subr.mxu0 0.0
    %557 = vmatpush1.xpose.msra.mxu0 0.0
    %558 = vmatprep.subr.mxu0 0.0
    %559 = vmatpush1.xpose.msra.mxu0 0.0
    %560 = vmatprep.subr.mxu0 0.0
    %561 = vmatpush1.xpose.msra.mxu0 0.0
    %562 = vmatprep.subr.mxu0 0.0
    %563 = vmatpush1.xpose.msra.mxu0 0.0
    %564 = vmatprep.subr.mxu0 0.0
    %565 = vmatpush1.xpose.msra.mxu0 0.0
    %566 = vmatprep.subr.mxu0 0.0
    %567 = vmatpush1.xpose.msra.mxu0 0.0
    %568 = vmatprep.subr.mxu0 0.0
    %569 = vmatpush1.xpose.msra.mxu0 0.0
    %570 = vmatprep.subr.mxu0 0.0
    %571 = vmatpush1.xpose.msra.mxu0 0.0
    %572 = vmatprep.subr.mxu0 0.0
    %573 = vmatpush1.xpose.msra.mxu0 0.0
    %574 = vmatprep.subr.mxu0 0.0
    %575 = vmatpush1.xpose.msra.mxu0 0.0
    %576 = vmatprep.subr.mxu0 0.0
    %577 = vmatpush1.xpose.msra.mxu0 0.0
    %578 = vmatprep.subr.mxu0 0.0
    %579 = vmatpush1.xpose.msra.mxu0 0.0
    %580 = vmatprep.subr.mxu0 0.0
    %581 = vmatpush1.xpose.msra.mxu0 0.0
    %582 = vmatprep.subr.mxu0 0.0
    %583 = vmatpush1.xpose.msra.mxu0 0.0
    %584 = vmatprep.subr.mxu0 0.0
    %585 = vmatpush1.xpose.msra.mxu0 0.0
    %586 = vmatprep.subr.mxu0 0.0
    %587 = vmatpush1.xpose.msra.mxu0 0.0
    %588 = vmatprep.subr.mxu0 0.0
    %589 = vmatpush1.xpose.msra.mxu0 0.0
    %590 = vmatprep.subr.mxu0 0.0
    %591 = vmatpush1.xpose.msra.mxu0 0.0
    %592 = vmatprep.subr.mxu0 0.0
    %593 = vmatpush1.xpose.msra.mxu0 0.0
    %594 = vmatprep.mubr.f32.mxu0 0.0
    %595 = vmatmul.mubr.f32.gmra.mrb[0].mxu0 %v522
    %v596 = vpop.f32.mrb[0].mxu0
    %v597 = vadd.f32 %v409, %v596
    %v598 = vpop.f32.mrb[0].mxu0
    %599 = vmatprep.mubr.f32.mxu0 0.0
    %600 = vmatmul.mubr.f32.gmra.mrb[0].mxu0 %v524
    %v601 = vpop.f32.mrb[0].mxu0
    %v602 = vadd.f32 %v410, %v601
    %v603 = vpop.f32.mrb[0].mxu0
    %604 = vdwg.mxu0
    %605 = vrot.lane.b32.xlu0 %v423, 96
    %v606 = vpop.permute.xlu0 %605
    %607 = vrot.lane.b32.xlu0 %v425, 96
    %v608 = vpop.permute.xlu0 %607
    %v609 = vsel %vm434, %v423, 0
    %v611 = vsel %vm434, %v425, 0
    %v613 = vsel %vm434, %v606, 0
    %v615 = vsel %vm434, %v608, 0
    %617 = vmatprep.subr.mxu0 0.0
    %618 = vmatpush1.xpose.msra.mxu0 %v613
    %619 = vmatprep.subr.mxu0 0.0
    %620 = vmatpush1.xpose.msra.mxu0 %v615
    %621 = vmatprep.subr.mxu0 0.0
    %622 = vmatpush1.xpose.msra.mxu0 0.0
    %623 = vmatprep.subr.mxu0 0.0
    %624 = vmatpush1.xpose.msra.mxu0 0.0
    %625 = vmatprep.subr.mxu0 0.0
    %626 = vmatpush1.xpose.msra.mxu0 0.0
    %627 = vmatprep.subr.mxu0 0.0
    %628 = vmatpush1.xpose.msra.mxu0 0.0
    %629 = vmatprep.subr.mxu0 0.0
    %630 = vmatpush1.xpose.msra.mxu0 0.0
    %631 = vmatprep.subr.mxu0 0.0
    %632 = vmatpush1.xpose.msra.mxu0 0.0
    %633 = vmatprep.subr.mxu0 0.0
    %634 = vmatpush1.xpose.msra.mxu0 0.0
    %635 = vmatprep.subr.mxu0 0.0
    %636 = vmatpush1.xpose.msra.mxu0 0.0
    %637 = vmatprep.subr.mxu0 0.0
    %638 = vmatpush1.xpose.msra.mxu0 0.0
    %639 = vmatprep.subr.mxu0 0.0
    %640 = vmatpush1.xpose.msra.mxu0 0.0
    %641 = vmatprep.subr.mxu0 0.0
    %642 = vmatpush1.xpose.msra.mxu0 0.0
    %643 = vmatprep.subr.mxu0 0.0
    %644 = vmatpush1.xpose.msra.mxu0 0.0
    %645 = vmatprep.subr.mxu0 0.0
    %646 = vmatpush1.xpose.msra.mxu0 0.0
    %647 = vmatprep.subr.mxu0 0.0
    %648 = vmatpush1.xpose.msra.mxu0 0.0
    %649 = vmatprep.subr.mxu0 0.0
    %650 = vmatpush1.xpose.msra.mxu0 0.0
    %651 = vmatprep.subr.mxu0 0.0
    %652 = vmatpush1.xpose.msra.mxu0 0.0
    %653 = vmatprep.subr.mxu0 0.0
    %654 = vmatpush1.xpose.msra.mxu0 0.0
    %655 = vmatprep.subr.mxu0 0.0
    %656 = vmatpush1.xpose.msra.mxu0 0.0
    %657 = vmatprep.subr.mxu0 0.0
    %658 = vmatpush1.xpose.msra.mxu0 0.0
    %659 = vmatprep.subr.mxu0 0.0
    %660 = vmatpush1.xpose.msra.mxu0 0.0
    %661 = vmatprep.subr.mxu0 0.0
    %662 = vmatpush1.xpose.msra.mxu0 0.0
    %663 = vmatprep.subr.mxu0 0.0
    %664 = vmatpush1.xpose.msra.mxu0 0.0
    %665 = vmatprep.subr.mxu0 0.0
    %666 = vmatpush1.xpose.msra.mxu0 0.0
    %667 = vmatprep.subr.mxu0 0.0
    %668 = vmatpush1.xpose.msra.mxu0 0.0
    %669 = vmatprep.subr.mxu0 0.0
    %670 = vmatpush1.xpose.msra.mxu0 0.0
    %671 = vmatprep.subr.mxu0 0.0
    %672 = vmatpush1.xpose.msra.mxu0 0.0
    %673 = vmatprep.subr.mxu0 0.0
    %674 = vmatpush1.xpose.msra.mxu0 0.0
    %675 = vmatprep.subr.mxu0 0.0
    %676 = vmatpush1.xpose.msra.mxu0 0.0
    %677 = vmatprep.subr.mxu0 0.0
    %678 = vmatpush1.xpose.msra.mxu0 0.0
    %679 = vmatprep.subr.mxu0 0.0
    %680 = vmatpush1.xpose.msra.mxu0 0.0
    %681 = vmatprep.mubr.f32.mxu0 0.0
    %682 = vmatmul.mubr.f32.gmra.mrb[0].mxu0 %v609
    %v683 = vpop.f32.mrb[0].mxu0
    %v684 = vadd.f32 %v409, %v683
    %v685 = vpop.f32.mrb[0].mxu0
    %686 = vmatprep.mubr.f32.mxu0 0.0
    %687 = vmatmul.mubr.f32.gmra.mrb[0].mxu0 %v611
    %v688 = vpop.f32.mrb[0].mxu0
    %v689 = vadd.f32 %v410, %v688
    %v690 = vpop.f32.mrb[0].mxu0
    %691 = vdwg.mxu0
    %692 = vrot.lane.b32.xlu0 %v427, 96
    %v693 = vpop.permute.xlu0 %692
    %694 = vrot.lane.b32.xlu0 %v429, 96
    %v695 = vpop.permute.xlu0 %694
    %v696 = vsel %vm434, %v427, 0
    %v698 = vsel %vm434, %v429, 0
    %v700 = vsel %vm434, %v693, 0
    %v702 = vsel %vm434, %v695, 0
    %704 = vmatprep.subr.mxu0 0.0
    %705 = vmatpush1.xpose.msra.mxu0 %v700
    %706 = vmatprep.subr.mxu0 0.0
    %707 = vmatpush1.xpose.msra.mxu0 %v702
    %708 = vmatprep.subr.mxu0 0.0
    %709 = vmatpush1.xpose.msra.mxu0 0.0
    %710 = vmatprep.subr.mxu0 0.0
    %711 = vmatpush1.xpose.msra.mxu0 0.0
    %712 = vmatprep.subr.mxu0 0.0
    %713 = vmatpush1.xpose.msra.mxu0 0.0
    %714 = vmatprep.subr.mxu0 0.0
    %715 = vmatpush1.xpose.msra.mxu0 0.0
    %716 = vmatprep.subr.mxu0 0.0
    %717 = vmatpush1.xpose.msra.mxu0 0.0
    %718 = vmatprep.subr.mxu0 0.0
    %719 = vmatpush1.xpose.msra.mxu0 0.0
    %720 = vmatprep.subr.mxu0 0.0
    %721 = vmatpush1.xpose.msra.mxu0 0.0
    %722 = vmatprep.subr.mxu0 0.0
    %723 = vmatpush1.xpose.msra.mxu0 0.0
    %724 = vmatprep.subr.mxu0 0.0
    %725 = vmatpush1.xpose.msra.mxu0 0.0
    %726 = vmatprep.subr.mxu0 0.0
    %727 = vmatpush1.xpose.msra.mxu0 0.0
    %728 = vmatprep.subr.mxu0 0.0
    %729 = vmatpush1.xpose.msra.mxu0 0.0
    %730 = vmatprep.subr.mxu0 0.0
    %731 = vmatpush1.xpose.msra.mxu0 0.0
    %732 = vmatprep.subr.mxu0 0.0
    %733 = vmatpush1.xpose.msra.mxu0 0.0
    %734 = vmatprep.subr.mxu0 0.0
    %735 = vmatpush1.xpose.msra.mxu0 0.0
    %736 = vmatprep.subr.mxu0 0.0
    %737 = vmatpush1.xpose.msra.mxu0 0.0
    %738 = vmatprep.subr.mxu0 0.0
    %739 = vmatpush1.xpose.msra.mxu0 0.0
    %740 = vmatprep.subr.mxu0 0.0
    %741 = vmatpush1.xpose.msra.mxu0 0.0
    %742 = vmatprep.subr.mxu0 0.0
    %743 = vmatpush1.xpose.msra.mxu0 0.0
    %744 = vmatprep.subr.mxu0 0.0
    %745 = vmatpush1.xpose.msra.mxu0 0.0
    %746 = vmatprep.subr.mxu0 0.0
    %747 = vmatpush1.xpose.msra.mxu0 0.0
    %748 = vmatprep.subr.mxu0 0.0
    %749 = vmatpush1.xpose.msra.mxu0 0.0
    %750 = vmatprep.subr.mxu0 0.0
    %751 = vmatpush1.xpose.msra.mxu0 0.0
    %752 = vmatprep.subr.mxu0 0.0
    %753 = vmatpush1.xpose.msra.mxu0 0.0
    %754 = vmatprep.subr.mxu0 0.0
    %755 = vmatpush1.xpose.msra.mxu0 0.0
    %756 = vmatprep.subr.mxu0 0.0
    %757 = vmatpush1.xpose.msra.mxu0 0.0
    %758 = vmatprep.subr.mxu0 0.0
    %759 = vmatpush1.xpose.msra.mxu0 0.0
    %760 = vmatprep.subr.mxu0 0.0
    %761 = vmatpush1.xpose.msra.mxu0 0.0
    %762 = vmatprep.subr.mxu0 0.0
    %763 = vmatpush1.xpose.msra.mxu0 0.0
    %764 = vmatprep.subr.mxu0 0.0
    %765 = vmatpush1.xpose.msra.mxu0 0.0
    %766 = vmatprep.subr.mxu0 0.0
    %767 = vmatpush1.xpose.msra.mxu0 0.0
    %768 = vmatprep.mubr.f32.mxu0 0.0
    %769 = vmatmul.mubr.f32.gmra.mrb[0].mxu0 %v696
    %v770 = vpop.f32.mrb[0].mxu0
    %v771 = vadd.f32 %v409, %v770
    %v772 = vpop.f32.mrb[0].mxu0
    %773 = vmatprep.mubr.f32.mxu0 0.0
    %774 = vmatmul.mubr.f32.gmra.mrb[0].mxu0 %v698
    %v775 = vpop.f32.mrb[0].mxu0
    %v776 = vadd.f32 %v410, %v775
    %v777 = vpop.f32.mrb[0].mxu0
    %778 = vdwg.mxu0
    %vm779 = vcmask 130048
    %v780 = vsel %vm779, %v510, -inf
    %781 = vmax.xlane.f32.xlu0 %v780
    %v782 = vpop.xlane.xlu0 %781
    %v783 = vsel %vm779, %v515, -inf
    %784 = vmax.xlane.f32.xlu0 %v783
    %v785 = vpop.xlane.xlu0 %784
    %v786 = vsel %vm779, %v597, -inf
    %787 = vmax.xlane.f32.xlu0 %v786
    %v788 = vpop.xlane.xlu0 %787
    %v789 = vsel %vm779, %v602, -inf
    %790 = vmax.xlane.f32.xlu0 %v789
    %v791 = vpop.xlane.xlu0 %790
    %v792 = vsel %vm779, %v684, -inf
    %793 = vmax.xlane.f32.xlu0 %v792
    %v794 = vpop.xlane.xlu0 %793
    %v795 = vsel %vm779, %v689, -inf
    %796 = vmax.xlane.f32.xlu0 %v795
    %v797 = vpop.xlane.xlu0 %796
    %v798 = vsel %vm779, %v771, -inf
    %799 = vmax.xlane.f32.xlu0 %v798
    %v800 = vpop.xlane.xlu0 %799
    %v801 = vsel %vm779, %v776, -inf
    %802 = vmax.xlane.f32.xlu0 %v801
    %v803 = vpop.xlane.xlu0 %802
    %v804 = vsub.f32 %v510, %v782
    %v805 = vsub.f32 %v515, %v785
    %v806 = vsub.f32 %v597, %v788
    %v807 = vsub.f32 %v602, %v791
    %v808 = vsub.f32 %v684, %v794
    %v809 = vsub.f32 %v689, %v797
    %v810 = vsub.f32 %v771, %v800
    %v811 = vsub.f32 %v776, %v803
    %v812 = vmul.f32 %v804, 1.442695
    %v813 = vpow.pop %v812
    %v814 = vmul.f32 %v805, 1.442695
    %v815 = vpow.pop %v814
    %v816 = vmul.f32 %v806, 1.442695
    %v817 = vpow.pop %v816
    %v818 = vmul.f32 %v807, 1.442695
    %v819 = vpow.pop %v818
    %v820 = vmul.f32 %v808, 1.442695
    %v821 = vpow.pop %v820
    %v822 = vmul.f32 %v809, 1.442695
    %v823 = vpow.pop %v822
    %v824 = vmul.f32 %v810, 1.442695
    %v825 = vpow.pop %v824
    %v826 = vmul.f32 %v811, 1.442695
    %v827 = vpow.pop %v826
    %v828 = vsel %vm779, %v813, 0.0
    %829 = vadd.xlane.f32.xlu0 %v828
    %v830 = vpop.xlane.xlu0 %829
    %v831 = vsel %vm779, %v815, 0.0
    %832 = vadd.xlane.f32.xlu0 %v831
    %v833 = vpop.xlane.xlu0 %832
    %v834 = vsel %vm779, %v817, 0.0
    %835 = vadd.xlane.f32.xlu0 %v834
    %v836 = vpop.xlane.xlu0 %835
    %v837 = vsel %vm779, %v819, 0.0
    %838 = vadd.xlane.f32.xlu0 %v837
    %v839 = vpop.xlane.xlu0 %838
    %v840 = vsel %vm779, %v821, 0.0
    %841 = vadd.xlane.f32.xlu0 %v840
    %v842 = vpop.xlane.xlu0 %841
    %v843 = vsel %vm779, %v823, 0.0
    %844 = vadd.xlane.f32.xlu0 %v843
    %v845 = vpop.xlane.xlu0 %844
    %v846 = vsel %vm779, %v825, 0.0
    %847 = vadd.xlane.f32.xlu0 %v846
    %v848 = vpop.xlane.xlu0 %847
    %v849 = vsel %vm779, %v827, 0.0
    %850 = vadd.xlane.f32.xlu0 %v849
    %v851 = vpop.xlane.xlu0 %850
    %v852 = vrcp.pop %v830
    %v853 = vrcp.pop %v833
    %v854 = vrcp.pop %v836
    %v855 = vrcp.pop %v839
    %v856 = vrcp.pop %v842
    %v857 = vrcp.pop %v845
    %v858 = vrcp.pop %v848
    %v859 = vrcp.pop %v851
    %v860 = vmul.f32 %v813, %v852
    %v861 = vmul.f32 %v815, %v853
    %v862 = vmul.f32 %v817, %v854
    %v863 = vmul.f32 %v819, %v855
    %v864 = vmul.f32 %v821, %v856
    %v865 = vmul.f32 %v823, %v857
    %v866 = vmul.f32 %v825, %v858
    %v867 = vmul.f32 %v827, %v859
    %868 = vrot.lane.b32.xlu0 %v309, 64
    %v869 = vpop.permute.xlu0 %868
    %870 = vrot.lane.b32.xlu0 %v314, 64
    %v871 = vpop.permute.xlu0 %870
    %v875 = vsel %vm779, %v860, 0
    %v878 = vsel %vm779, %v861, 0
    %880 = vmatprep.subr.mxu0 0.0
    %881 = vmatpush1.msra.mxu0 %v869
    %882 = vmatprep.subr.mxu0 0.0
    %883 = vmatpush1.msra.mxu0 %v871
    %884 = vmatprep.subr.mxu0 0.0
    %885 = vmatpush1.msra.mxu0 0.0
    %886 = vmatprep.subr.mxu0 0.0
    %887 = vmatpush1.msra.mxu0 0.0
    %888 = vmatprep.subr.mxu0 0.0
    %889 = vmatpush1.msra.mxu0 0.0
    %890 = vmatprep.subr.mxu0 0.0
    %891 = vmatpush1.msra.mxu0 0.0
    %892 = vmatprep.subr.mxu0 0.0
    %893 = vmatpush1.msra.mxu0 0.0
    %894 = vmatprep.subr.mxu0 0.0
    %895 = vmatpush1.msra.mxu0 0.0
    %896 = vmatprep.subr.mxu0 0.0
    %897 = vmatpush1.msra.mxu0 0.0
    %898 = vmatprep.subr.mxu0 0.0
    %899 = vmatpush1.msra.mxu0 0.0
    %900 = vmatprep.subr.mxu0 0.0
    %901 = vmatpush1.msra.mxu0 0.0
    %902 = vmatprep.subr.mxu0 0.0
    %903 = vmatpush1.msra.mxu0 0.0
    %904 = vmatprep.subr.mxu0 0.0
    %905 = vmatpush1.msra.mxu0 0.0
    %906 = vmatprep.subr.mxu0 0.0
    %907 = vmatpush1.msra.mxu0 0.0
    %908 = vmatprep.subr.mxu0 0.0
    %909 = vmatpush1.msra.mxu0 0.0
    %910 = vmatprep.subr.mxu0 0.0
    %911 = vmatpush1.msra.mxu0 0.0
    %912 = vmatprep.subr.mxu0 0.0
    %913 = vmatpush1.msra.mxu0 0.0
    %914 = vmatprep.subr.mxu0 0.0
    %915 = vmatpush1.msra.mxu0 0.0
    %916 = vmatprep.subr.mxu0 0.0
    %917 = vmatpush1.msra.mxu0 0.0
    %918 = vmatprep.subr.mxu0 0.0
    %919 = vmatpush1.msra.mxu0 0.0
    %920 = vmatprep.subr.mxu0 0.0
    %921 = vmatpush1.msra.mxu0 0.0
    %922 = vmatprep.subr.mxu0 0.0
    %923 = vmatpush1.msra.mxu0 0.0
    %924 = vmatprep.subr.mxu0 0.0
    %925 = vmatpush1.msra.mxu0 0.0
    %926 = vmatprep.subr.mxu0 0.0
    %927 = vmatpush1.msra.mxu0 0.0
    %928 = vmatprep.subr.mxu0 0.0
    %929 = vmatpush1.msra.mxu0 0.0
    %930 = vmatprep.subr.mxu0 0.0
    %931 = vmatpush1.msra.mxu0 0.0
    %932 = vmatprep.subr.mxu0 0.0
    %933 = vmatpush1.msra.mxu0 0.0
    %934 = vmatprep.subr.mxu0 0.0
    %935 = vmatpush1.msra.mxu0 0.0
    %936 = vmatprep.subr.mxu0 0.0
    %937 = vmatpush1.msra.mxu0 0.0
    %938 = vmatprep.subr.mxu0 0.0
    %939 = vmatpush1.msra.mxu0 0.0
    %940 = vmatprep.subr.mxu0 0.0
    %941 = vmatpush1.msra.mxu0 0.0
    %942 = vmatprep.subr.mxu0 0.0
    %943 = vmatpush1.msra.mxu0 0.0
    %944 = vmatprep.mubr.f32.mxu0 0.0
    %945 = vmatmul.mubr.f32.gmra.mrb[0].mxu0 %v875
    %v946 = vpop.f32.mrb[0].mxu0
    %v947 = vadd.f32 0.0, %v946
    %v948 = vpop.f32.mrb[0].mxu0
    %949 = vmatprep.mubr.f32.mxu0 0.0
    %950 = vmatmul.mubr.f32.gmra.mrb[0].mxu0 %v878
    %v951 = vpop.f32.mrb[0].mxu0
    %v952 = vadd.f32 0.0, %v951
    %v953 = vpop.f32.mrb[0].mxu0
    %954 = vdwg.mxu0
    %955 = vrot.lane.b32.xlu0 %v419, 64
    %v956 = vpop.permute.xlu0 %955
    %957 = vrot.lane.b32.xlu0 %v421, 64
    %v958 = vpop.permute.xlu0 %957
    %v962 = vsel %vm779, %v862, 0
    %v965 = vsel %vm779, %v863, 0
    %967 = vmatprep.subr.mxu0 0.0
    %968 = vmatpush1.msra.mxu0 %v956
    %969 = vmatprep.subr.mxu0 0.0
    %970 = vmatpush1.msra.mxu0 %v958
    %971 = vmatprep.subr.mxu0 0.0
    %972 = vmatpush1.msra.mxu0 0.0
    %973 = vmatprep.subr.mxu0 0.0
    %974 = vmatpush1.msra.mxu0 0.0
    %975 = vmatprep.subr.mxu0 0.0
    %976 = vmatpush1.msra.mxu0 0.0
    %977 = vmatprep.subr.mxu0 0.0
    %978 = vmatpush1.msra.mxu0 0.0
    %979 = vmatprep.subr.mxu0 0.0
    %980 = vmatpush1.msra.mxu0 0.0
    %981 = vmatprep.subr.mxu0 0.0
    %982 = vmatpush1.msra.mxu0 0.0
    %983 = vmatprep.subr.mxu0 0.0
    %984 = vmatpush1.msra.mxu0 0.0
    %985 = vmatprep.subr.mxu0 0.0
    %986 = vmatpush1.msra.mxu0 0.0
    %987 = vmatprep.subr.mxu0 0.0
    %988 = vmatpush1.msra.mxu0 0.0
    %989 = vmatprep.subr.mxu0 0.0
    %990 = vmatpush1.msra.mxu0 0.0
    %991 = vmatprep.subr.mxu0 0.0
    %992 = vmatpush1.msra.mxu0 0.0
    %993 = vmatprep.subr.mxu0 0.0
    %994 = vmatpush1.msra.mxu0 0.0
    %995 = vmatprep.subr.mxu0 0.0
    %996 = vmatpush1.msra.mxu0 0.0
    %997 = vmatprep.subr.mxu0 0.0
    %998 = vmatpush1.msra.mxu0 0.0
    %999 = vmatprep.subr.mxu0 0.0
    %1000 = vmatpush1.msra.mxu0 0.0
    %1001 = vmatprep.subr.mxu0 0.0
    %1002 = vmatpush1.msra.mxu0 0.0
    %1003 = vmatprep.subr.mxu0 0.0
    %1004 = vmatpush1.msra.mxu0 0.0
    %1005 = vmatprep.subr.mxu0 0.0
    %1006 = vmatpush1.msra.mxu0 0.0
    %1007 = vmatprep.subr.mxu0 0.0
    %1008 = vmatpush1.msra.mxu0 0.0
    %1009 = vmatprep.subr.mxu0 0.0
    %1010 = vmatpush1.msra.mxu0 0.0
    %1011 = vmatprep.subr.mxu0 0.0
    %1012 = vmatpush1.msra.mxu0 0.0
    %1013 = vmatprep.subr.mxu0 0.0
    %1014 = vmatpush1.msra.mxu0 0.0
    %1015 = vmatprep.subr.mxu0 0.0
    %1016 = vmatpush1.msra.mxu0 0.0
    %1017 = vmatprep.subr.mxu0 0.0
    %1018 = vmatpush1.msra.mxu0 0.0
    %1019 = vmatprep.subr.mxu0 0.0
    %1020 = vmatpush1.msra.mxu0 0.0
    %1021 = vmatprep.subr.mxu0 0.0
    %1022 = vmatpush1.msra.mxu0 0.0
    %1023 = vmatprep.subr.mxu0 0.0
    %1024 = vmatpush1.msra.mxu0 0.0
    %1025 = vmatprep.subr.mxu0 0.0
    %1026 = vmatpush1.msra.mxu0 0.0
    %1027 = vmatprep.subr.mxu0 0.0
    %1028 = vmatpush1.msra.mxu0 0.0
    %1029 = vmatprep.subr.mxu0 0.0
    %1030 = vmatpush1.msra.mxu0 0.0
    %1031 = vmatprep.mubr.f32.mxu0 0.0
    %1032 = vmatmul.mubr.f32.gmra.mrb[0].mxu0 %v962
    %v1033 = vpop.f32.mrb[0].mxu0
    %v1034 = vadd.f32 0.0, %v1033
    %v1035 = vpop.f32.mrb[0].mxu0
    %1036 = vmatprep.mubr.f32.mxu0 0.0
    %1037 = vmatmul.mubr.f32.gmra.mrb[0].mxu0 %v965
    %v1038 = vpop.f32.mrb[0].mxu0
    %v1039 = vadd.f32 0.0, %v1038
    %v1040 = vpop.f32.mrb[0].mxu0
    %1041 = vdwg.mxu0
    %1042 = vrot.lane.b32.xlu0 %v423, 64
    %v1043 = vpop.permute.xlu0 %1042
    %1044 = vrot.lane.b32.xlu0 %v425, 64
    %v1045 = vpop.permute.xlu0 %1044
    %v1049 = vsel %vm779, %v864, 0
    %v1052 = vsel %vm779, %v865, 0
    %1054 = vmatprep.subr.mxu0 0.0
    %1055 = vmatpush1.msra.mxu0 %v1043
    %1056 = vmatprep.subr.mxu0 0.0
    %1057 = vmatpush1.msra.mxu0 %v1045
    %1058 = vmatprep.subr.mxu0 0.0
    %1059 = vmatpush1.msra.mxu0 0.0
    %1060 = vmatprep.subr.mxu0 0.0
    %1061 = vmatpush1.msra.mxu0 0.0
    %1062 = vmatprep.subr.mxu0 0.0
    %1063 = vmatpush1.msra.mxu0 0.0
    %1064 = vmatprep.subr.mxu0 0.0
    %1065 = vmatpush1.msra.mxu0 0.0
    %1066 = vmatprep.subr.mxu0 0.0
    %1067 = vmatpush1.msra.mxu0 0.0
    %1068 = vmatprep.subr.mxu0 0.0
    %1069 = vmatpush1.msra.mxu0 0.0
    %1070 = vmatprep.subr.mxu0 0.0
    %1071 = vmatpush1.msra.mxu0 0.0
    %1072 = vmatprep.subr.mxu0 0.0
    %1073 = vmatpush1.msra.mxu0 0.0
    %1074 = vmatprep.subr.mxu0 0.0
    %1075 = vmatpush1.msra.mxu0 0.0
    %1076 = vmatprep.subr.mxu0 0.0
    %1077 = vmatpush1.msra.mxu0 0.0
    %1078 = vmatprep.subr.mxu0 0.0
    %1079 = vmatpush1.msra.mxu0 0.0
    %1080 = vmatprep.subr.mxu0 0.0
    %1081 = vmatpush1.msra.mxu0 0.0
    %1082 = vmatprep.subr.mxu0 0.0
    %1083 = vmatpush1.msra.mxu0 0.0
    %1084 = vmatprep.subr.mxu0 0.0
    %1085 = vmatpush1.msra.mxu0 0.0
    %1086 = vmatprep.subr.mxu0 0.0
    %1087 = vmatpush1.msra.mxu0 0.0
    %1088 = vmatprep.subr.mxu0 0.0
    %1089 = vmatpush1.msra.mxu0 0.0
    %1090 = vmatprep.subr.mxu0 0.0
    %1091 = vmatpush1.msra.mxu0 0.0
    %1092 = vmatprep.subr.mxu0 0.0
    %1093 = vmatpush1.msra.mxu0 0.0
    %1094 = vmatprep.subr.mxu0 0.0
    %1095 = vmatpush1.msra.mxu0 0.0
    %1096 = vmatprep.subr.mxu0 0.0
    %1097 = vmatpush1.msra.mxu0 0.0
    %1098 = vmatprep.subr.mxu0 0.0
    %1099 = vmatpush1.msra.mxu0 0.0
    %1100 = vmatprep.subr.mxu0 0.0
    %1101 = vmatpush1.msra.mxu0 0.0
    %1102 = vmatprep.subr.mxu0 0.0
    %1103 = vmatpush1.msra.mxu0 0.0
    %1104 = vmatprep.subr.mxu0 0.0
    %1105 = vmatpush1.msra.mxu0 0.0
    %1106 = vmatprep.subr.mxu0 0.0
    %1107 = vmatpush1.msra.mxu0 0.0
    %1108 = vmatprep.subr.mxu0 0.0
    %1109 = vmatpush1.msra.mxu0 0.0
    %1110 = vmatprep.subr.mxu0 0.0
    %1111 = vmatpush1.msra.mxu0 0.0
    %1112 = vmatprep.subr.mxu0 0.0
    %1113 = vmatpush1.msra.mxu0 0.0
    %1114 = vmatprep.subr.mxu0 0.0
    %1115 = vmatpush1.msra.mxu0 0.0
    %1116 = vmatprep.subr.mxu0 0.0
    %1117 = vmatpush1.msra.mxu0 0.0
    %1118 = vmatprep.mubr.f32.mxu0 0.0
    %1119 = vmatmul.mubr.f32.gmra.mrb[0].mxu0 %v1049
    %v1120 = vpop.f32.mrb[0].mxu0
    %v1121 = vadd.f32 0.0, %v1120
    %v1122 = vpop.f32.mrb[0].mxu0
    %1123 = vmatprep.mubr.f32.mxu0 0.0
    %1124 = vmatmul.mubr.f32.gmra.mrb[0].mxu0 %v1052
    %v1125 = vpop.f32.mrb[0].mxu0
    %v1126 = vadd.f32 0.0, %v1125
    %v1127 = vpop.f32.mrb[0].mxu0
    %1128 = vdwg.mxu0
    %1129 = vrot.lane.b32.xlu0 %v427, 64
    %v1130 = vpop.permute.xlu0 %1129
    %1131 = vrot.lane.b32.xlu0 %v429, 64
    %v1132 = vpop.permute.xlu0 %1131
    %v1136 = vsel %vm779, %v866, 0
    %v1139 = vsel %vm779, %v867, 0
    %1141 = vmatprep.subr.mxu0 0.0
    %1142 = vmatpush1.msra.mxu0 %v1130
    %1143 = vmatprep.subr.mxu0 0.0
    %1144 = vmatpush1.msra.mxu0 %v1132
    %1145 = vmatprep.subr.mxu0 0.0
    %1146 = vmatpush1.msra.mxu0 0.0
    %1147 = vmatprep.subr.mxu0 0.0
    %1148 = vmatpush1.msra.mxu0 0.0
    %1149 = vmatprep.subr.mxu0 0.0
    %1150 = vmatpush1.msra.mxu0 0.0
    %1151 = vmatprep.subr.mxu0 0.0
    %1152 = vmatpush1.msra.mxu0 0.0
    %1153 = vmatprep.subr.mxu0 0.0
    %1154 = vmatpush1.msra.mxu0 0.0
    %1155 = vmatprep.subr.mxu0 0.0
    %1156 = vmatpush1.msra.mxu0 0.0
    %1157 = vmatprep.subr.mxu0 0.0
    %1158 = vmatpush1.msra.mxu0 0.0
    %1159 = vmatprep.subr.mxu0 0.0
    %1160 = vmatpush1.msra.mxu0 0.0
    %1161 = vmatprep.subr.mxu0 0.0
    %1162 = vmatpush1.msra.mxu0 0.0
    %1163 = vmatprep.subr.mxu0 0.0
    %1164 = vmatpush1.msra.mxu0 0.0
    %1165 = vmatprep.subr.mxu0 0.0
    %1166 = vmatpush1.msra.mxu0 0.0
    %1167 = vmatprep.subr.mxu0 0.0
    %1168 = vmatpush1.msra.mxu0 0.0
    %1169 = vmatprep.subr.mxu0 0.0
    %1170 = vmatpush1.msra.mxu0 0.0
    %1171 = vmatprep.subr.mxu0 0.0
    %1172 = vmatpush1.msra.mxu0 0.0
    %1173 = vmatprep.subr.mxu0 0.0
    %1174 = vmatpush1.msra.mxu0 0.0
    %1175 = vmatprep.subr.mxu0 0.0
    %1176 = vmatpush1.msra.mxu0 0.0
    %1177 = vmatprep.subr.mxu0 0.0
    %1178 = vmatpush1.msra.mxu0 0.0
    %1179 = vmatprep.subr.mxu0 0.0
    %1180 = vmatpush1.msra.mxu0 0.0
    %1181 = vmatprep.subr.mxu0 0.0
    %1182 = vmatpush1.msra.mxu0 0.0
    %1183 = vmatprep.subr.mxu0 0.0
    %1184 = vmatpush1.msra.mxu0 0.0
    %1185 = vmatprep.subr.mxu0 0.0
    %1186 = vmatpush1.msra.mxu0 0.0
    %1187 = vmatprep.subr.mxu0 0.0
    %1188 = vmatpush1.msra.mxu0 0.0
    %1189 = vmatprep.subr.mxu0 0.0
    %1190 = vmatpush1.msra.mxu0 0.0
    %1191 = vmatprep.subr.mxu0 0.0
    %1192 = vmatpush1.msra.mxu0 0.0
    %1193 = vmatprep.subr.mxu0 0.0
    %1194 = vmatpush1.msra.mxu0 0.0
    %1195 = vmatprep.subr.mxu0 0.0
    %1196 = vmatpush1.msra.mxu0 0.0
    %1197 = vmatprep.subr.mxu0 0.0
    %1198 = vmatpush1.msra.mxu0 0.0
    %1199 = vmatprep.subr.mxu0 0.0
    %1200 = vmatpush1.msra.mxu0 0.0
    %1201 = vmatprep.subr.mxu0 0.0
    %1202 = vmatpush1.msra.mxu0 0.0
    %1203 = vmatprep.subr.mxu0 0.0
    %1204 = vmatpush1.msra.mxu0 0.0
    %1205 = vmatprep.mubr.f32.mxu0 0.0
    %1206 = vmatmul.mubr.f32.gmra.mrb[0].mxu0 %v1136
    %v1207 = vpop.f32.mrb[0].mxu0
    %v1208 = vadd.f32 0.0, %v1207
    %v1209 = vpop.f32.mrb[0].mxu0
    %1210 = vmatprep.mubr.f32.mxu0 0.0
    %1211 = vmatmul.mubr.f32.gmra.mrb[0].mxu0 %v1139
    %v1212 = vpop.f32.mrb[0].mxu0
    %v1213 = vadd.f32 0.0, %v1212
    %v1214 = vpop.f32.mrb[0].mxu0
    %1215 = vdwg.mxu0
    %1218 = vrot.lane.b32.xlu0 %v1034, 8
    %v1219 = vpop.permute.xlu0 %1218
    %1220 = vrot.lane.b32.xlu0 %v1039, 8
    %v1221 = vpop.permute.xlu0 %1220
    %1226 = vrot.lane.b32.xlu0 %v1121, 16
    %v1227 = vpop.permute.xlu0 %1226
    %1228 = vrot.lane.b32.xlu0 %v1126, 16
    %v1229 = vpop.permute.xlu0 %1228
    %1234 = vrot.lane.b32.xlu0 %v1208, 24
    %v1235 = vpop.permute.xlu0 %1234
    %1236 = vrot.lane.b32.xlu0 %v1213, 24
    %v1237 = vpop.permute.xlu0 %1236
    %v1240 = vsel %vm434, %v947, %v1219
    %v1241 = vsel %vm434, %v952, %v1221
    %v1242 = vsel %vm779, %v1240, %v1227
    %v1243 = vsel %vm779, %v1241, %v1229
    %vm1244 = vcmask 195584
    %v1245 = vsel %vm1244, %v1242, %v1235
    %v1246 = vsel %vm1244, %v1243, %v1237
    %v1248 = vlaneseq
    %v1249 = vshrl.u32 %v1248, 7
    %v1250 = vsub.s32 0, %v1249
    %v1251 = vrot.slane %v415, %v1250
    %v1254 = vsel %vm235, %v1245, 0
    %v1257 = vsel %vm235, %v1246, 0
    %1259 = vmatprep.subr.mxu0 0.0
    %1260 = vmatpush1.msra.mxu0 %v411
    %1261 = vmatprep.subr.mxu0 0.0
    %1262 = vmatpush1.msra.mxu0 %v412
    %1263 = vmatprep.subr.mxu0 0.0
    %1264 = vmatpush1.msra.mxu0 %v413
    %1265 = vmatprep.subr.mxu0 0.0
    %1266 = vmatpush1.msra.mxu0 %v414
    %1267 = vmatprep.subr.mxu0 0.0
    %1268 = vmatpush1.msra.mxu0 0.0
    %1269 = vmatprep.subr.mxu0 0.0
    %1270 = vmatpush1.msra.mxu0 0.0
    %1271 = vmatprep.subr.mxu0 0.0
    %1272 = vmatpush1.msra.mxu0 0.0
    %1273 = vmatprep.subr.mxu0 0.0
    %1274 = vmatpush1.msra.mxu0 0.0
    %1275 = vmatprep.subr.mxu0 0.0
    %1276 = vmatpush1.msra.mxu0 0.0
    %1277 = vmatprep.subr.mxu0 0.0
    %1278 = vmatpush1.msra.mxu0 0.0
    %1279 = vmatprep.subr.mxu0 0.0
    %1280 = vmatpush1.msra.mxu0 0.0
    %1281 = vmatprep.subr.mxu0 0.0
    %1282 = vmatpush1.msra.mxu0 0.0
    %1283 = vmatprep.subr.mxu0 0.0
    %1284 = vmatpush1.msra.mxu0 0.0
    %1285 = vmatprep.subr.mxu0 0.0
    %1286 = vmatpush1.msra.mxu0 0.0
    %1287 = vmatprep.subr.mxu0 0.0
    %1288 = vmatpush1.msra.mxu0 0.0
    %1289 = vmatprep.subr.mxu0 0.0
    %1290 = vmatpush1.msra.mxu0 0.0
    %1291 = vmatprep.subr.mxu0 0.0
    %1292 = vmatpush1.msra.mxu0 0.0
    %1293 = vmatprep.subr.mxu0 0.0
    %1294 = vmatpush1.msra.mxu0 0.0
    %1295 = vmatprep.subr.mxu0 0.0
    %1296 = vmatpush1.msra.mxu0 0.0
    %1297 = vmatprep.subr.mxu0 0.0
    %1298 = vmatpush1.msra.mxu0 0.0
    %1299 = vmatprep.subr.mxu0 0.0
    %1300 = vmatpush1.msra.mxu0 0.0
    %1301 = vmatprep.subr.mxu0 0.0
    %1302 = vmatpush1.msra.mxu0 0.0
    %1303 = vmatprep.subr.mxu0 0.0
    %1304 = vmatpush1.msra.mxu0 0.0
    %1305 = vmatprep.subr.mxu0 0.0
    %1306 = vmatpush1.msra.mxu0 0.0
    %1307 = vmatprep.subr.mxu0 0.0
    %1308 = vmatpush1.msra.mxu0 0.0
    %1309 = vmatprep.subr.mxu0 0.0
    %1310 = vmatpush1.msra.mxu0 0.0
    %1311 = vmatprep.subr.mxu0 0.0
    %1312 = vmatpush1.msra.mxu0 0.0
    %1313 = vmatprep.subr.mxu0 0.0
    %1314 = vmatpush1.msra.mxu0 0.0
    %1315 = vmatprep.subr.mxu0 0.0
    %1316 = vmatpush1.msra.mxu0 0.0
    %1317 = vmatprep.subr.mxu0 0.0
    %1318 = vmatpush1.msra.mxu0 0.0
    %1319 = vmatprep.subr.mxu0 0.0
    %1320 = vmatpush1.msra.mxu0 0.0
    %1321 = vmatprep.subr.mxu0 0.0
    %1322 = vmatpush1.msra.mxu0 0.0
    %1323 = vmatprep.mubr.f32.mxu0 0.0
    %1324 = vmatmul.mubr.f32.gmra.mrb[0].mxu0 %v1254
    %v1325 = vpop.f32.mrb[0].mxu0
    %v1326 = vadd.f32 %v1251, %v1325
    %v1327 = vpop.f32.mrb[0].mxu0
    %1328 = vmatprep.mubr.f32.mxu0 0.0
    %1329 = vmatmul.mubr.f32.gmra.mrb[0].mxu0 %v1257
    %v1330 = vpop.f32.mrb[0].mxu0
    %v1331 = vadd.f32 %v1251, %v1330
    %v1332 = vpop.f32.mrb[0].mxu0
    %1333 = vdwg.mxu0
    %v1334 = vadd.f32 %v1326, %v214
    %v1335 = vadd.f32 %v1331, %v219
    %s1336 = sld [smem:[#allocation9]]
    %s1337 = sld [smem:[#allocation9 + $0x1]]
    %v1338 = vsel %vm235, %v1334, 0.0
    %1339 = vadd.xlane.f32.xlu0 %v1338
    %v1340 = vpop.xlane.xlu0 %1339
    %v1341 = vsel %vm235, %v1335, 0.0
    %1342 = vadd.xlane.f32.xlu0 %v1341
    %v1343 = vpop.xlane.xlu0 %1342
    %v1344 = vrcp.pop 32.0
    %v1345 = vmul.f32 %v1340, %v1344
    %v1346 = vmul.f32 %v1343, %v1344
    %v1347 = vsub.f32 %v1334, %v1345
    %v1348 = vsub.f32 %v1335, %v1346
    %v1349 = vmul.f32 %v1347, %v1347
    %v1350 = vmul.f32 %v1348, %v1348
    %v1351 = vsel %vm235, %v1349, 0.0
    %1352 = vadd.xlane.f32.xlu0 %v1351
    %v1353 = vpop.xlane.xlu0 %1352
    %v1354 = vsel %vm235, %v1350, 0.0
    %1355 = vadd.xlane.f32.xlu0 %v1354
    %v1356 = vpop.xlane.xlu0 %1355
    %v1357 = vmul.f32 %v1353, 0.032258064
    %v1358 = vmul.f32 %v1356, 0.032258064
    %v1359 = vstv %s1336
    %v1360 = vmul.f32 %v1359, %v1347
    %v1361 = vmul.f32 %v1359, %v1348
    %v1362 = vadd.f32 %v1357, 1e-06
    %v1363 = vadd.f32 %v1358, 1e-06
    %v1364 = vrsqrt.pop %v1362
    %v1365 = vrsqrt.pop %v1363
    %v1366 = vmul.f32 %v1360, %v1364
    %v1367 = vmul.f32 %v1361, %v1365
    %v1368 = vstv %s1337
    %v1369 = vadd.f32 %v1366, %v1368
    %v1370 = vadd.f32 %v1367, %v1368
    %v1371 = vld [vmem:[#allocation8] sm:$0xff]
    %v1372 = vld [vmem:[#allocation8 + $0x8] sm:$0xff]
    %s1373 = scalar_lea.vmem %s10, 32
    %v1374 = vld [vmem:[%s1373] sm:$0xff]
    %v1375 = vld [vmem:[%s1373 + $0x8] sm:$0xff]
    %v1376 = vld [vmem:[%s1373 + $0x10] sm:$0xff]
    %v1377 = vld [vmem:[%s1373 + $0x18] sm:$0xff]
    %s1378 = scalar_lea.vmem %s11, 1
    %v1379 = vld [vmem:[%s1378] sm:$0x1]
    %1382 = vrot.lane.b32.xlu0 %v401, 120
    %v1383 = vpop.permute.xlu0 %1382
    %1384 = vrot.lane.b32.xlu0 %v406, 120
    %v1385 = vpop.permute.xlu0 %1384
    %1386 = vrot.lane.b32.xlu0 %v401, 112
    %v1387 = vpop.permute.xlu0 %1386
    %1388 = vrot.lane.b32.xlu0 %v406, 112
    %v1389 = vpop.permute.xlu0 %1388
    %1390 = vrot.lane.b32.xlu0 %v401, 104
    %v1391 = vpop.permute.xlu0 %1390
    %1392 = vrot.lane.b32.xlu0 %v406, 104
    %v1393 = vpop.permute.xlu0 %1392
    %1394 = vrot.lane.b32.xlu0 %v309, 32
    %v1395 = vpop.permute.xlu0 %1394
    %1396 = vrot.lane.b32.xlu0 %v314, 32
    %v1397 = vpop.permute.xlu0 %1396
    %v1398 = vsel %vm434, %v1395, 0
    %v1400 = vsel %vm434, %v1397, 0
    %v1402 = vsel %vm434, %v401, 0
    %v1404 = vsel %vm434, %v406, 0
    %1406 = vmatprep.subr.mxu0 0.0
    %1407 = vmatpush1.xpose.msra.mxu0 %v1402
    %1408 = vmatprep.subr.mxu0 0.0
    %1409 = vmatpush1.xpose.msra.mxu0 %v1404
    %1410 = vmatprep.subr.mxu0 0.0
    %1411 = vmatpush1.xpose.msra.mxu0 0.0
    %1412 = vmatprep.subr.mxu0 0.0
    %1413 = vmatpush1.xpose.msra.mxu0 0.0
    %1414 = vmatprep.subr.mxu0 0.0
    %1415 = vmatpush1.xpose.msra.mxu0 0.0
    %1416 = vmatprep.subr.mxu0 0.0
    %1417 = vmatpush1.xpose.msra.mxu0 0.0
    %1418 = vmatprep.subr.mxu0 0.0
    %1419 = vmatpush1.xpose.msra.mxu0 0.0
    %1420 = vmatprep.subr.mxu0 0.0
    %1421 = vmatpush1.xpose.msra.mxu0 0.0
    %1422 = vmatprep.subr.mxu0 0.0
    %1423 = vmatpush1.xpose.msra.mxu0 0.0
    %1424 = vmatprep.subr.mxu0 0.0
    %1425 = vmatpush1.xpose.msra.mxu0 0.0
    %1426 = vmatprep.subr.mxu0 0.0
    %1427 = vmatpush1.xpose.msra.mxu0 0.0
    %1428 = vmatprep.subr.mxu0 0.0
    %1429 = vmatpush1.xpose.msra.mxu0 0.0
    %1430 = vmatprep.subr.mxu0 0.0
    %1431 = vmatpush1.xpose.msra.mxu0 0.0
    %1432 = vmatprep.subr.mxu0 0.0
    %1433 = vmatpush1.xpose.msra.mxu0 0.0
    %1434 = vmatprep.subr.mxu0 0.0
    %1435 = vmatpush1.xpose.msra.mxu0 0.0
    %1436 = vmatprep.subr.mxu0 0.0
    %1437 = vmatpush1.xpose.msra.mxu0 0.0
    %1438 = vmatprep.subr.mxu0 0.0
    %1439 = vmatpush1.xpose.msra.mxu0 0.0
    %1440 = vmatprep.subr.mxu0 0.0
    %1441 = vmatpush1.xpose.msra.mxu0 0.0
    %1442 = vmatprep.subr.mxu0 0.0
    %1443 = vmatpush1.xpose.msra.mxu0 0.0
    %1444 = vmatprep.subr.mxu0 0.0
    %1445 = vmatpush1.xpose.msra.mxu0 0.0
    %1446 = vmatprep.subr.mxu0 0.0
    %1447 = vmatpush1.xpose.msra.mxu0 0.0
    %1448 = vmatprep.subr.mxu0 0.0
    %1449 = vmatpush1.xpose.msra.mxu0 0.0
    %1450 = vmatprep.subr.mxu0 0.0
    %1451 = vmatpush1.xpose.msra.mxu0 0.0
    %1452 = vmatprep.subr.mxu0 0.0
    %1453 = vmatpush1.xpose.msra.mxu0 0.0
    %1454 = vmatprep.subr.mxu0 0.0
    %1455 = vmatpush1.xpose.msra.mxu0 0.0
    %1456 = vmatprep.subr.mxu0 0.0
    %1457 = vmatpush1.xpose.msra.mxu0 0.0
    %1458 = vmatprep.subr.mxu0 0.0
    %1459 = vmatpush1.xpose.msra.mxu0 0.0
    %1460 = vmatprep.subr.mxu0 0.0
    %1461 = vmatpush1.xpose.msra.mxu0 0.0
    %1462 = vmatprep.subr.mxu0 0.0
    %1463 = vmatpush1.xpose.msra.mxu0 0.0
    %1464 = vmatprep.subr.mxu0 0.0
    %1465 = vmatpush1.xpose.msra.mxu0 0.0
    %1466 = vmatprep.subr.mxu0 0.0
    %1467 = vmatpush1.xpose.msra.mxu0 0.0
    %1468 = vmatprep.subr.mxu0 0.0
    %1469 = vmatpush1.xpose.msra.mxu0 0.0
    %1470 = vmatprep.mubr.f32.mxu0 0.0
    %1471 = vmatmul.mubr.f32.gmra.mrb[0].mxu0 %v1398
    %v1472 = vpop.f32.mrb[0].mxu0
    %v1473 = vadd.f32 %v1371, %v1472
    %v1474 = vpop.f32.mrb[0].mxu0
    %1475 = vmatprep.mubr.f32.mxu0 0.0
    %1476 = vmatmul.mubr.f32.gmra.mrb[0].mxu0 %v1400
    %v1477 = vpop.f32.mrb[0].mxu0
    %v1478 = vadd.f32 %v1372, %v1477
    %v1479 = vpop.f32.mrb[0].mxu0
    %1480 = vdwg.mxu0
    %1481 = vrot.lane.b32.xlu0 %v419, 32
    %v1482 = vpop.permute.xlu0 %1481
    %1483 = vrot.lane.b32.xlu0 %v421, 32
    %v1484 = vpop.permute.xlu0 %1483
    %v1485 = vsel %vm434, %v1482, 0
    %v1487 = vsel %vm434, %v1484, 0
    %v1489 = vsel %vm434, %v1383, 0
    %v1491 = vsel %vm434, %v1385, 0
    %1493 = vmatprep.subr.mxu0 0.0
    %1494 = vmatpush1.xpose.msra.mxu0 %v1489
    %1495 = vmatprep.subr.mxu0 0.0
    %1496 = vmatpush1.xpose.msra.mxu0 %v1491
    %1497 = vmatprep.subr.mxu0 0.0
    %1498 = vmatpush1.xpose.msra.mxu0 0.0
    %1499 = vmatprep.subr.mxu0 0.0
    %1500 = vmatpush1.xpose.msra.mxu0 0.0
    %1501 = vmatprep.subr.mxu0 0.0
    %1502 = vmatpush1.xpose.msra.mxu0 0.0
    %1503 = vmatprep.subr.mxu0 0.0
    %1504 = vmatpush1.xpose.msra.mxu0 0.0
    %1505 = vmatprep.subr.mxu0 0.0
    %1506 = vmatpush1.xpose.msra.mxu0 0.0
    %1507 = vmatprep.subr.mxu0 0.0
    %1508 = vmatpush1.xpose.msra.mxu0 0.0
    %1509 = vmatprep.subr.mxu0 0.0
    %1510 = vmatpush1.xpose.msra.mxu0 0.0
    %1511 = vmatprep.subr.mxu0 0.0
    %1512 = vmatpush1.xpose.msra.mxu0 0.0
    %1513 = vmatprep.subr.mxu0 0.0
    %1514 = vmatpush1.xpose.msra.mxu0 0.0
    %1515 = vmatprep.subr.mxu0 0.0
    %1516 = vmatpush1.xpose.msra.mxu0 0.0
    %1517 = vmatprep.subr.mxu0 0.0
    %1518 = vmatpush1.xpose.msra.mxu0 0.0
    %1519 = vmatprep.subr.mxu0 0.0
    %1520 = vmatpush1.xpose.msra.mxu0 0.0
    %1521 = vmatprep.subr.mxu0 0.0
    %1522 = vmatpush1.xpose.msra.mxu0 0.0
    %1523 = vmatprep.subr.mxu0 0.0
    %1524 = vmatpush1.xpose.msra.mxu0 0.0
    %1525 = vmatprep.subr.mxu0 0.0
    %1526 = vmatpush1.xpose.msra.mxu0 0.0
    %1527 = vmatprep.subr.mxu0 0.0
    %1528 = vmatpush1.xpose.msra.mxu0 0.0
    %1529 = vmatprep.subr.mxu0 0.0
    %1530 = vmatpush1.xpose.msra.mxu0 0.0
    %1531 = vmatprep.subr.mxu0 0.0
    %1532 = vmatpush1.xpose.msra.mxu0 0.0
    %1533 = vmatprep.subr.mxu0 0.0
    %1534 = vmatpush1.xpose.msra.mxu0 0.0
    %1535 = vmatprep.subr.mxu0 0.0
    %1536 = vmatpush1.xpose.msra.mxu0 0.0
    %1537 = vmatprep.subr.mxu0 0.0
    %1538 = vmatpush1.xpose.msra.mxu0 0.0
    %1539 = vmatprep.subr.mxu0 0.0
    %1540 = vmatpush1.xpose.msra.mxu0 0.0
    %1541 = vmatprep.subr.mxu0 0.0
    %1542 = vmatpush1.xpose.msra.mxu0 0.0
    %1543 = vmatprep.subr.mxu0 0.0
    %1544 = vmatpush1.xpose.msra.mxu0 0.0
    %1545 = vmatprep.subr.mxu0 0.0
    %1546 = vmatpush1.xpose.msra.mxu0 0.0
    %1547 = vmatprep.subr.mxu0 0.0
    %1548 = vmatpush1.xpose.msra.mxu0 0.0
    %1549 = vmatprep.subr.mxu0 0.0
    %1550 = vmatpush1.xpose.msra.mxu0 0.0
    %1551 = vmatprep.subr.mxu0 0.0
    %1552 = vmatpush1.xpose.msra.mxu0 0.0
    %1553 = vmatprep.subr.mxu0 0.0
    %1554 = vmatpush1.xpose.msra.mxu0 0.0
    %1555 = vmatprep.subr.mxu0 0.0
    %1556 = vmatpush1.xpose.msra.mxu0 0.0
    %1557 = vmatprep.mubr.f32.mxu0 0.0
    %1558 = vmatmul.mubr.f32.gmra.mrb[0].mxu0 %v1485
    %v1559 = vpop.f32.mrb[0].mxu0
    %v1560 = vadd.f32 %v1371, %v1559
    %v1561 = vpop.f32.mrb[0].mxu0
    %1562 = vmatprep.mubr.f32.mxu0 0.0
    %1563 = vmatmul.mubr.f32.gmra.mrb[0].mxu0 %v1487
    %v1564 = vpop.f32.mrb[0].mxu0
    %v1565 = vadd.f32 %v1372, %v1564
    %v1566 = vpop.f32.mrb[0].mxu0
    %1567 = vdwg.mxu0
    %1568 = vrot.lane.b32.xlu0 %v423, 32
    %v1569 = vpop.permute.xlu0 %1568
    %1570 = vrot.lane.b32.xlu0 %v425, 32
    %v1571 = vpop.permute.xlu0 %1570
    %v1572 = vsel %vm434, %v1569, 0
    %v1574 = vsel %vm434, %v1571, 0
    %v1576 = vsel %vm434, %v1387, 0
    %v1578 = vsel %vm434, %v1389, 0
    %1580 = vmatprep.subr.mxu0 0.0
    %1581 = vmatpush1.xpose.msra.mxu0 %v1576
    %1582 = vmatprep.subr.mxu0 0.0
    %1583 = vmatpush1.xpose.msra.mxu0 %v1578
    %1584 = vmatprep.subr.mxu0 0.0
    %1585 = vmatpush1.xpose.msra.mxu0 0.0
    %1586 = vmatprep.subr.mxu0 0.0
    %1587 = vmatpush1.xpose.msra.mxu0 0.0
    %1588 = vmatprep.subr.mxu0 0.0
    %1589 = vmatpush1.xpose.msra.mxu0 0.0
    %1590 = vmatprep.subr.mxu0 0.0
    %1591 = vmatpush1.xpose.msra.mxu0 0.0
    %1592 = vmatprep.subr.mxu0 0.0
    %1593 = vmatpush1.xpose.msra.mxu0 0.0
    %1594 = vmatprep.subr.mxu0 0.0
    %1595 = vmatpush1.xpose.msra.mxu0 0.0
    %1596 = vmatprep.subr.mxu0 0.0
    %1597 = vmatpush1.xpose.msra.mxu0 0.0
    %1598 = vmatprep.subr.mxu0 0.0
    %1599 = vmatpush1.xpose.msra.mxu0 0.0
    %1600 = vmatprep.subr.mxu0 0.0
    %1601 = vmatpush1.xpose.msra.mxu0 0.0
    %1602 = vmatprep.subr.mxu0 0.0
    %1603 = vmatpush1.xpose.msra.mxu0 0.0
    %1604 = vmatprep.subr.mxu0 0.0
    %1605 = vmatpush1.xpose.msra.mxu0 0.0
    %1606 = vmatprep.subr.mxu0 0.0
    %1607 = vmatpush1.xpose.msra.mxu0 0.0
    %1608 = vmatprep.subr.mxu0 0.0
    %1609 = vmatpush1.xpose.msra.mxu0 0.0
    %1610 = vmatprep.subr.mxu0 0.0
    %1611 = vmatpush1.xpose.msra.mxu0 0.0
    %1612 = vmatprep.subr.mxu0 0.0
    %1613 = vmatpush1.xpose.msra.mxu0 0.0
    %1614 = vmatprep.subr.mxu0 0.0
    %1615 = vmatpush1.xpose.msra.mxu0 0.0
    %1616 = vmatprep.subr.mxu0 0.0
    %1617 = vmatpush1.xpose.msra.mxu0 0.0
    %1618 = vmatprep.subr.mxu0 0.0
    %1619 = vmatpush1.xpose.msra.mxu0 0.0
    %1620 = vmatprep.subr.mxu0 0.0
    %1621 = vmatpush1.xpose.msra.mxu0 0.0
    %1622 = vmatprep.subr.mxu0 0.0
    %1623 = vmatpush1.xpose.msra.mxu0 0.0
    %1624 = vmatprep.subr.mxu0 0.0
    %1625 = vmatpush1.xpose.msra.mxu0 0.0
    %1626 = vmatprep.subr.mxu0 0.0
    %1627 = vmatpush1.xpose.msra.mxu0 0.0
    %1628 = vmatprep.subr.mxu0 0.0
    %1629 = vmatpush1.xpose.msra.mxu0 0.0
    %1630 = vmatprep.subr.mxu0 0.0
    %1631 = vmatpush1.xpose.msra.mxu0 0.0
    %1632 = vmatprep.subr.mxu0 0.0
    %1633 = vmatpush1.xpose.msra.mxu0 0.0
    %1634 = vmatprep.subr.mxu0 0.0
    %1635 = vmatpush1.xpose.msra.mxu0 0.0
    %1636 = vmatprep.subr.mxu0 0.0
    %1637 = vmatpush1.xpose.msra.mxu0 0.0
    %1638 = vmatprep.subr.mxu0 0.0
    %1639 = vmatpush1.xpose.msra.mxu0 0.0
    %1640 = vmatprep.subr.mxu0 0.0
    %1641 = vmatpush1.xpose.msra.mxu0 0.0
    %1642 = vmatprep.subr.mxu0 0.0
    %1643 = vmatpush1.xpose.msra.mxu0 0.0
    %1644 = vmatprep.mubr.f32.mxu0 0.0
    %1645 = vmatmul.mubr.f32.gmra.mrb[0].mxu0 %v1572
    %v1646 = vpop.f32.mrb[0].mxu0
    %v1647 = vadd.f32 %v1371, %v1646
    %v1648 = vpop.f32.mrb[0].mxu0
    %1649 = vmatprep.mubr.f32.mxu0 0.0
    %1650 = vmatmul.mubr.f32.gmra.mrb[0].mxu0 %v1574
    %v1651 = vpop.f32.mrb[0].mxu0
    %v1652 = vadd.f32 %v1372, %v1651
    %v1653 = vpop.f32.mrb[0].mxu0
    %1654 = vdwg.mxu0
    %1655 = vrot.lane.b32.xlu0 %v427, 32
    %v1656 = vpop.permute.xlu0 %1655
    %1657 = vrot.lane.b32.xlu0 %v429, 32
    %v1658 = vpop.permute.xlu0 %1657
    %v1659 = vsel %vm434, %v1656, 0
    %v1661 = vsel %vm434, %v1658, 0
    %v1663 = vsel %vm434, %v1391, 0
    %v1665 = vsel %vm434, %v1393, 0
    %1667 = vmatprep.subr.mxu0 0.0
    %1668 = vmatpush1.xpose.msra.mxu0 %v1663
    %1669 = vmatprep.subr.mxu0 0.0
    %1670 = vmatpush1.xpose.msra.mxu0 %v1665
    %1671 = vmatprep.subr.mxu0 0.0
    %1672 = vmatpush1.xpose.msra.mxu0 0.0
    %1673 = vmatprep.subr.mxu0 0.0
    %1674 = vmatpush1.xpose.msra.mxu0 0.0
    %1675 = vmatprep.subr.mxu0 0.0
    %1676 = vmatpush1.xpose.msra.mxu0 0.0
    %1677 = vmatprep.subr.mxu0 0.0
    %1678 = vmatpush1.xpose.msra.mxu0 0.0
    %1679 = vmatprep.subr.mxu0 0.0
    %1680 = vmatpush1.xpose.msra.mxu0 0.0
    %1681 = vmatprep.subr.mxu0 0.0
    %1682 = vmatpush1.xpose.msra.mxu0 0.0
    %1683 = vmatprep.subr.mxu0 0.0
    %1684 = vmatpush1.xpose.msra.mxu0 0.0
    %1685 = vmatprep.subr.mxu0 0.0
    %1686 = vmatpush1.xpose.msra.mxu0 0.0
    %1687 = vmatprep.subr.mxu0 0.0
    %1688 = vmatpush1.xpose.msra.mxu0 0.0
    %1689 = vmatprep.subr.mxu0 0.0
    %1690 = vmatpush1.xpose.msra.mxu0 0.0
    %1691 = vmatprep.subr.mxu0 0.0
    %1692 = vmatpush1.xpose.msra.mxu0 0.0
    %1693 = vmatprep.subr.mxu0 0.0
    %1694 = vmatpush1.xpose.msra.mxu0 0.0
    %1695 = vmatprep.subr.mxu0 0.0
    %1696 = vmatpush1.xpose.msra.mxu0 0.0
    %1697 = vmatprep.subr.mxu0 0.0
    %1698 = vmatpush1.xpose.msra.mxu0 0.0
    %1699 = vmatprep.subr.mxu0 0.0
    %1700 = vmatpush1.xpose.msra.mxu0 0.0
    %1701 = vmatprep.subr.mxu0 0.0
    %1702 = vmatpush1.xpose.msra.mxu0 0.0
    %1703 = vmatprep.subr.mxu0 0.0
    %1704 = vmatpush1.xpose.msra.mxu0 0.0
    %1705 = vmatprep.subr.mxu0 0.0
    %1706 = vmatpush1.xpose.msra.mxu0 0.0
    %1707 = vmatprep.subr.mxu0 0.0
    %1708 = vmatpush1.xpose.msra.mxu0 0.0
    %1709 = vmatprep.subr.mxu0 0.0
    %1710 = vmatpush1.xpose.msra.mxu0 0.0
    %1711 = vmatprep.subr.mxu0 0.0
    %1712 = vmatpush1.xpose.msra.mxu0 0.0
    %1713 = vmatprep.subr.mxu0 0.0
    %1714 = vmatpush1.xpose.msra.mxu0 0.0
    %1715 = vmatprep.subr.mxu0 0.0
    %1716 = vmatpush1.xpose.msra.mxu0 0.0
    %1717 = vmatprep.subr.mxu0 0.0
    %1718 = vmatpush1.xpose.msra.mxu0 0.0
    %1719 = vmatprep.subr.mxu0 0.0
    %1720 = vmatpush1.xpose.msra.mxu0 0.0
    %1721 = vmatprep.subr.mxu0 0.0
    %1722 = vmatpush1.xpose.msra.mxu0 0.0
    %1723 = vmatprep.subr.mxu0 0.0
    %1724 = vmatpush1.xpose.msra.mxu0 0.0
    %1725 = vmatprep.subr.mxu0 0.0
    %1726 = vmatpush1.xpose.msra.mxu0 0.0
    %1727 = vmatprep.subr.mxu0 0.0
    %1728 = vmatpush1.xpose.msra.mxu0 0.0
    %1729 = vmatprep.subr.mxu0 0.0
    %1730 = vmatpush1.xpose.msra.mxu0 0.0
    %1731 = vmatprep.mubr.f32.mxu0 0.0
    %1732 = vmatmul.mubr.f32.gmra.mrb[0].mxu0 %v1659
    %v1733 = vpop.f32.mrb[0].mxu0
    %v1734 = vadd.f32 %v1371, %v1733
    %v1735 = vpop.f32.mrb[0].mxu0
    %1736 = vmatprep.mubr.f32.mxu0 0.0
    %1737 = vmatmul.mubr.f32.gmra.mrb[0].mxu0 %v1661
    %v1738 = vpop.f32.mrb[0].mxu0
    %v1739 = vadd.f32 %v1372, %v1738
    %v1740 = vpop.f32.mrb[0].mxu0
    %1741 = vdwg.mxu0
    %v1742 = vsel %vm779, %v1473, -inf
    %1743 = vmax.xlane.f32.xlu0 %v1742
    %v1744 = vpop.xlane.xlu0 %1743
    %v1745 = vsel %vm779, %v1478, -inf
    %1746 = vmax.xlane.f32.xlu0 %v1745
    %v1747 = vpop.xlane.xlu0 %1746
    %v1748 = vsel %vm779, %v1560, -inf
    %1749 = vmax.xlane.f32.xlu0 %v1748
    %v1750 = vpop.xlane.xlu0 %1749
    %v1751 = vsel %vm779, %v1565, -inf
    %1752 = vmax.xlane.f32.xlu0 %v1751
    %v1753 = vpop.xlane.xlu0 %1752
    %v1754 = vsel %vm779, %v1647, -inf
    %1755 = vmax.xlane.f32.xlu0 %v1754
    %v1756 = vpop.xlane.xlu0 %1755
    %v1757 = vsel %vm779, %v1652, -inf
    %1758 = vmax.xlane.f32.xlu0 %v1757
    %v1759 = vpop.xlane.xlu0 %1758
    %v1760 = vsel %vm779, %v1734, -inf
    %1761 = vmax.xlane.f32.xlu0 %v1760
    %v1762 = vpop.xlane.xlu0 %1761
    %v1763 = vsel %vm779, %v1739, -inf
    %1764 = vmax.xlane.f32.xlu0 %v1763
    %v1765 = vpop.xlane.xlu0 %1764
    %v1766 = vsub.f32 %v1473, %v1744
    %v1767 = vsub.f32 %v1478, %v1747
    %v1768 = vsub.f32 %v1560, %v1750
    %v1769 = vsub.f32 %v1565, %v1753
    %v1770 = vsub.f32 %v1647, %v1756
    %v1771 = vsub.f32 %v1652, %v1759
    %v1772 = vsub.f32 %v1734, %v1762
    %v1773 = vsub.f32 %v1739, %v1765
    %v1774 = vmul.f32 %v1766, 1.442695
    %v1775 = vpow.pop %v1774
    %v1776 = vmul.f32 %v1767, 1.442695
    %v1777 = vpow.pop %v1776
    %v1778 = vmul.f32 %v1768, 1.442695
    %v1779 = vpow.pop %v1778
    %v1780 = vmul.f32 %v1769, 1.442695
    %v1781 = vpow.pop %v1780
    %v1782 = vmul.f32 %v1770, 1.442695
    %v1783 = vpow.pop %v1782
    %v1784 = vmul.f32 %v1771, 1.442695
    %v1785 = vpow.pop %v1784
    %v1786 = vmul.f32 %v1772, 1.442695
    %v1787 = vpow.pop %v1786
    %v1788 = vmul.f32 %v1773, 1.442695
    %v1789 = vpow.pop %v1788
    %v1790 = vsel %vm779, %v1775, 0.0
    %1791 = vadd.xlane.f32.xlu0 %v1790
    %v1792 = vpop.xlane.xlu0 %1791
    %v1793 = vsel %vm779, %v1777, 0.0
    %1794 = vadd.xlane.f32.xlu0 %v1793
    %v1795 = vpop.xlane.xlu0 %1794
    %v1796 = vsel %vm779, %v1779, 0.0
    %1797 = vadd.xlane.f32.xlu0 %v1796
    %v1798 = vpop.xlane.xlu0 %1797
    %v1799 = vsel %vm779, %v1781, 0.0
    %1800 = vadd.xlane.f32.xlu0 %v1799
    %v1801 = vpop.xlane.xlu0 %1800
    %v1802 = vsel %vm779, %v1783, 0.0
    %1803 = vadd.xlane.f32.xlu0 %v1802
    %v1804 = vpop.xlane.xlu0 %1803
    %v1805 = vsel %vm779, %v1785, 0.0
    %1806 = vadd.xlane.f32.xlu0 %v1805
    %v1807 = vpop.xlane.xlu0 %1806
    %v1808 = vsel %vm779, %v1787, 0.0
    %1809 = vadd.xlane.f32.xlu0 %v1808
    %v1810 = vpop.xlane.xlu0 %1809
    %v1811 = vsel %vm779, %v1789, 0.0
    %1812 = vadd.xlane.f32.xlu0 %v1811
    %v1813 = vpop.xlane.xlu0 %1812
    %v1814 = vrcp.pop %v1792
    %v1815 = vrcp.pop %v1795
    %v1816 = vrcp.pop %v1798
    %v1817 = vrcp.pop %v1801
    %v1818 = vrcp.pop %v1804
    %v1819 = vrcp.pop %v1807
    %v1820 = vrcp.pop %v1810
    %v1821 = vrcp.pop %v1813
    %v1822 = vmul.f32 %v1775, %v1814
    %v1823 = vmul.f32 %v1777, %v1815
    %v1824 = vmul.f32 %v1779, %v1816
    %v1825 = vmul.f32 %v1781, %v1817
    %v1826 = vmul.f32 %v1783, %v1818
    %v1827 = vmul.f32 %v1785, %v1819
    %v1828 = vmul.f32 %v1787, %v1820
    %v1829 = vmul.f32 %v1789, %v1821
    %1830 = vrot.lane.b32.xlu0 %v401, 96
    %v1831 = vpop.permute.xlu0 %1830
    %1832 = vrot.lane.b32.xlu0 %v406, 96
    %v1833 = vpop.permute.xlu0 %1832
    %v1837 = vsel %vm779, %v1822, 0
    %v1840 = vsel %vm779, %v1823, 0
    %1842 = vmatprep.subr.mxu0 0.0
    %1843 = vmatpush1.msra.mxu0 %v1831
    %1844 = vmatprep.subr.mxu0 0.0
    %1845 = vmatpush1.msra.mxu0 %v1833
    %1846 = vmatprep.subr.mxu0 0.0
    %1847 = vmatpush1.msra.mxu0 0.0
    %1848 = vmatprep.subr.mxu0 0.0
    %1849 = vmatpush1.msra.mxu0 0.0
    %1850 = vmatprep.subr.mxu0 0.0
    %1851 = vmatpush1.msra.mxu0 0.0
    %1852 = vmatprep.subr.mxu0 0.0
    %1853 = vmatpush1.msra.mxu0 0.0
    %1854 = vmatprep.subr.mxu0 0.0
    %1855 = vmatpush1.msra.mxu0 0.0
    %1856 = vmatprep.subr.mxu0 0.0
    %1857 = vmatpush1.msra.mxu0 0.0
    %1858 = vmatprep.subr.mxu0 0.0
    %1859 = vmatpush1.msra.mxu0 0.0
    %1860 = vmatprep.subr.mxu0 0.0
    %1861 = vmatpush1.msra.mxu0 0.0
    %1862 = vmatprep.subr.mxu0 0.0
    %1863 = vmatpush1.msra.mxu0 0.0
    %1864 = vmatprep.subr.mxu0 0.0
    %1865 = vmatpush1.msra.mxu0 0.0
    %1866 = vmatprep.subr.mxu0 0.0
    %1867 = vmatpush1.msra.mxu0 0.0
    %1868 = vmatprep.subr.mxu0 0.0
    %1869 = vmatpush1.msra.mxu0 0.0
    %1870 = vmatprep.subr.mxu0 0.0
    %1871 = vmatpush1.msra.mxu0 0.0
    %1872 = vmatprep.subr.mxu0 0.0
    %1873 = vmatpush1.msra.mxu0 0.0
    %1874 = vmatprep.subr.mxu0 0.0
    %1875 = vmatpush1.msra.mxu0 0.0
    %1876 = vmatprep.subr.mxu0 0.0
    %1877 = vmatpush1.msra.mxu0 0.0
    %1878 = vmatprep.subr.mxu0 0.0
    %1879 = vmatpush1.msra.mxu0 0.0
    %1880 = vmatprep.subr.mxu0 0.0
    %1881 = vmatpush1.msra.mxu0 0.0
    %1882 = vmatprep.subr.mxu0 0.0
    %1883 = vmatpush1.msra.mxu0 0.0
    %1884 = vmatprep.subr.mxu0 0.0
    %1885 = vmatpush1.msra.mxu0 0.0
    %1886 = vmatprep.subr.mxu0 0.0
    %1887 = vmatpush1.msra.mxu0 0.0
    %1888 = vmatprep.subr.mxu0 0.0
    %1889 = vmatpush1.msra.mxu0 0.0
    %1890 = vmatprep.subr.mxu0 0.0
    %1891 = vmatpush1.msra.mxu0 0.0
    %1892 = vmatprep.subr.mxu0 0.0
    %1893 = vmatpush1.msra.mxu0 0.0
    %1894 = vmatprep.subr.mxu0 0.0
    %1895 = vmatpush1.msra.mxu0 0.0
    %1896 = vmatprep.subr.mxu0 0.0
    %1897 = vmatpush1.msra.mxu0 0.0
    %1898 = vmatprep.subr.mxu0 0.0
    %1899 = vmatpush1.msra.mxu0 0.0
    %1900 = vmatprep.subr.mxu0 0.0
    %1901 = vmatpush1.msra.mxu0 0.0
    %1902 = vmatprep.subr.mxu0 0.0
    %1903 = vmatpush1.msra.mxu0 0.0
    %1904 = vmatprep.subr.mxu0 0.0
    %1905 = vmatpush1.msra.mxu0 0.0
    %1906 = vmatprep.mubr.f32.mxu0 0.0
    %1907 = vmatmul.mubr.f32.gmra.mrb[0].mxu0 %v1837
    %v1908 = vpop.f32.mrb[0].mxu0
    %v1909 = vadd.f32 0.0, %v1908
    %v1910 = vpop.f32.mrb[0].mxu0
    %1911 = vmatprep.mubr.f32.mxu0 0.0
    %1912 = vmatmul.mubr.f32.gmra.mrb[0].mxu0 %v1840
    %v1913 = vpop.f32.mrb[0].mxu0
    %v1914 = vadd.f32 0.0, %v1913
    %v1915 = vpop.f32.mrb[0].mxu0
    %1916 = vdwg.mxu0
    %1917 = vrot.lane.b32.xlu0 %v1383, 96
    %v1918 = vpop.permute.xlu0 %1917
    %1919 = vrot.lane.b32.xlu0 %v1385, 96
    %v1920 = vpop.permute.xlu0 %1919
    %v1924 = vsel %vm779, %v1824, 0
    %v1927 = vsel %vm779, %v1825, 0
    %1929 = vmatprep.subr.mxu0 0.0
    %1930 = vmatpush1.msra.mxu0 %v1918
    %1931 = vmatprep.subr.mxu0 0.0
    %1932 = vmatpush1.msra.mxu0 %v1920
    %1933 = vmatprep.subr.mxu0 0.0
    %1934 = vmatpush1.msra.mxu0 0.0
    %1935 = vmatprep.subr.mxu0 0.0
    %1936 = vmatpush1.msra.mxu0 0.0
    %1937 = vmatprep.subr.mxu0 0.0
    %1938 = vmatpush1.msra.mxu0 0.0
    %1939 = vmatprep.subr.mxu0 0.0
    %1940 = vmatpush1.msra.mxu0 0.0
    %1941 = vmatprep.subr.mxu0 0.0
    %1942 = vmatpush1.msra.mxu0 0.0
    %1943 = vmatprep.subr.mxu0 0.0
    %1944 = vmatpush1.msra.mxu0 0.0
    %1945 = vmatprep.subr.mxu0 0.0
    %1946 = vmatpush1.msra.mxu0 0.0
    %1947 = vmatprep.subr.mxu0 0.0
    %1948 = vmatpush1.msra.mxu0 0.0
    %1949 = vmatprep.subr.mxu0 0.0
    %1950 = vmatpush1.msra.mxu0 0.0
    %1951 = vmatprep.subr.mxu0 0.0
    %1952 = vmatpush1.msra.mxu0 0.0
    %1953 = vmatprep.subr.mxu0 0.0
    %1954 = vmatpush1.msra.mxu0 0.0
    %1955 = vmatprep.subr.mxu0 0.0
    %1956 = vmatpush1.msra.mxu0 0.0
    %1957 = vmatprep.subr.mxu0 0.0
    %1958 = vmatpush1.msra.mxu0 0.0
    %1959 = vmatprep.subr.mxu0 0.0
    %1960 = vmatpush1.msra.mxu0 0.0
    %1961 = vmatprep.subr.mxu0 0.0
    %1962 = vmatpush1.msra.mxu0 0.0
    %1963 = vmatprep.subr.mxu0 0.0
    %1964 = vmatpush1.msra.mxu0 0.0
    %1965 = vmatprep.subr.mxu0 0.0
    %1966 = vmatpush1.msra.mxu0 0.0
    %1967 = vmatprep.subr.mxu0 0.0
    %1968 = vmatpush1.msra.mxu0 0.0
    %1969 = vmatprep.subr.mxu0 0.0
    %1970 = vmatpush1.msra.mxu0 0.0
    %1971 = vmatprep.subr.mxu0 0.0
    %1972 = vmatpush1.msra.mxu0 0.0
    %1973 = vmatprep.subr.mxu0 0.0
    %1974 = vmatpush1.msra.mxu0 0.0
    %1975 = vmatprep.subr.mxu0 0.0
    %1976 = vmatpush1.msra.mxu0 0.0
    %1977 = vmatprep.subr.mxu0 0.0
    %1978 = vmatpush1.msra.mxu0 0.0
    %1979 = vmatprep.subr.mxu0 0.0
    %1980 = vmatpush1.msra.mxu0 0.0
    %1981 = vmatprep.subr.mxu0 0.0
    %1982 = vmatpush1.msra.mxu0 0.0
    %1983 = vmatprep.subr.mxu0 0.0
    %1984 = vmatpush1.msra.mxu0 0.0
    %1985 = vmatprep.subr.mxu0 0.0
    %1986 = vmatpush1.msra.mxu0 0.0
    %1987 = vmatprep.subr.mxu0 0.0
    %1988 = vmatpush1.msra.mxu0 0.0
    %1989 = vmatprep.subr.mxu0 0.0
    %1990 = vmatpush1.msra.mxu0 0.0
    %1991 = vmatprep.subr.mxu0 0.0
    %1992 = vmatpush1.msra.mxu0 0.0
    %1993 = vmatprep.mubr.f32.mxu0 0.0
    %1994 = vmatmul.mubr.f32.gmra.mrb[0].mxu0 %v1924
    %v1995 = vpop.f32.mrb[0].mxu0
    %v1996 = vadd.f32 0.0, %v1995
    %v1997 = vpop.f32.mrb[0].mxu0
    %1998 = vmatprep.mubr.f32.mxu0 0.0
    %1999 = vmatmul.mubr.f32.gmra.mrb[0].mxu0 %v1927
    %v2000 = vpop.f32.mrb[0].mxu0
    %v2001 = vadd.f32 0.0, %v2000
    %v2002 = vpop.f32.mrb[0].mxu0
    %2003 = vdwg.mxu0
    %2004 = vrot.lane.b32.xlu0 %v1387, 96
    %v2005 = vpop.permute.xlu0 %2004
    %2006 = vrot.lane.b32.xlu0 %v1389, 96
    %v2007 = vpop.permute.xlu0 %2006
    %v2011 = vsel %vm779, %v1826, 0
    %v2014 = vsel %vm779, %v1827, 0
    %2016 = vmatprep.subr.mxu0 0.0
    %2017 = vmatpush1.msra.mxu0 %v2005
    %2018 = vmatprep.subr.mxu0 0.0
    %2019 = vmatpush1.msra.mxu0 %v2007
    %2020 = vmatprep.subr.mxu0 0.0
    %2021 = vmatpush1.msra.mxu0 0.0
    %2022 = vmatprep.subr.mxu0 0.0
    %2023 = vmatpush1.msra.mxu0 0.0
    %2024 = vmatprep.subr.mxu0 0.0
    %2025 = vmatpush1.msra.mxu0 0.0
    %2026 = vmatprep.subr.mxu0 0.0
    %2027 = vmatpush1.msra.mxu0 0.0
    %2028 = vmatprep.subr.mxu0 0.0
    %2029 = vmatpush1.msra.mxu0 0.0
    %2030 = vmatprep.subr.mxu0 0.0
    %2031 = vmatpush1.msra.mxu0 0.0
    %2032 = vmatprep.subr.mxu0 0.0
    %2033 = vmatpush1.msra.mxu0 0.0
    %2034 = vmatprep.subr.mxu0 0.0
    %2035 = vmatpush1.msra.mxu0 0.0
    %2036 = vmatprep.subr.mxu0 0.0
    %2037 = vmatpush1.msra.mxu0 0.0
    %2038 = vmatprep.subr.mxu0 0.0
    %2039 = vmatpush1.msra.mxu0 0.0
    %2040 = vmatprep.subr.mxu0 0.0
    %2041 = vmatpush1.msra.mxu0 0.0
    %2042 = vmatprep.subr.mxu0 0.0
    %2043 = vmatpush1.msra.mxu0 0.0
    %2044 = vmatprep.subr.mxu0 0.0
    %2045 = vmatpush1.msra.mxu0 0.0
    %2046 = vmatprep.subr.mxu0 0.0
    %2047 = vmatpush1.msra.mxu0 0.0
    %2048 = vmatprep.subr.mxu0 0.0
    %2049 = vmatpush1.msra.mxu0 0.0
    %2050 = vmatprep.subr.mxu0 0.0
    %2051 = vmatpush1.msra.mxu0 0.0
    %2052 = vmatprep.subr.mxu0 0.0
    %2053 = vmatpush1.msra.mxu0 0.0
    %2054 = vmatprep.subr.mxu0 0.0
    %2055 = vmatpush1.msra.mxu0 0.0
    %2056 = vmatprep.subr.mxu0 0.0
    %2057 = vmatpush1.msra.mxu0 0.0
    %2058 = vmatprep.subr.mxu0 0.0
    %2059 = vmatpush1.msra.mxu0 0.0
    %2060 = vmatprep.subr.mxu0 0.0
    %2061 = vmatpush1.msra.mxu0 0.0
    %2062 = vmatprep.subr.mxu0 0.0
    %2063 = vmatpush1.msra.mxu0 0.0
    %2064 = vmatprep.subr.mxu0 0.0
    %2065 = vmatpush1.msra.mxu0 0.0
    %2066 = vmatprep.subr.mxu0 0.0
    %2067 = vmatpush1.msra.mxu0 0.0
    %2068 = vmatprep.subr.mxu0 0.0
    %2069 = vmatpush1.msra.mxu0 0.0
    %2070 = vmatprep.subr.mxu0 0.0
    %2071 = vmatpush1.msra.mxu0 0.0
    %2072 = vmatprep.subr.mxu0 0.0
    %2073 = vmatpush1.msra.mxu0 0.0
    %2074 = vmatprep.subr.mxu0 0.0
    %2075 = vmatpush1.msra.mxu0 0.0
    %2076 = vmatprep.subr.mxu0 0.0
    %2077 = vmatpush1.msra.mxu0 0.0
    %2078 = vmatprep.subr.mxu0 0.0
    %2079 = vmatpush1.msra.mxu0 0.0
    %2080 = vmatprep.mubr.f32.mxu0 0.0
    %2081 = vmatmul.mubr.f32.gmra.mrb[0].mxu0 %v2011
    %v2082 = vpop.f32.mrb[0].mxu0
    %v2083 = vadd.f32 0.0, %v2082
    %v2084 = vpop.f32.mrb[0].mxu0
    %2085 = vmatprep.mubr.f32.mxu0 0.0
    %2086 = vmatmul.mubr.f32.gmra.mrb[0].mxu0 %v2014
    %v2087 = vpop.f32.mrb[0].mxu0
    %v2088 = vadd.f32 0.0, %v2087
    %v2089 = vpop.f32.mrb[0].mxu0
    %2090 = vdwg.mxu0
    %2091 = vrot.lane.b32.xlu0 %v1391, 96
    %v2092 = vpop.permute.xlu0 %2091
    %2093 = vrot.lane.b32.xlu0 %v1393, 96
    %v2094 = vpop.permute.xlu0 %2093
    %v2098 = vsel %vm779, %v1828, 0
    %v2101 = vsel %vm779, %v1829, 0
    %2103 = vmatprep.subr.mxu0 0.0
    %2104 = vmatpush1.msra.mxu0 %v2092
    %2105 = vmatprep.subr.mxu0 0.0
    %2106 = vmatpush1.msra.mxu0 %v2094
    %2107 = vmatprep.subr.mxu0 0.0
    %2108 = vmatpush1.msra.mxu0 0.0
    %2109 = vmatprep.subr.mxu0 0.0
    %2110 = vmatpush1.msra.mxu0 0.0
    %2111 = vmatprep.subr.mxu0 0.0
    %2112 = vmatpush1.msra.mxu0 0.0
    %2113 = vmatprep.subr.mxu0 0.0
    %2114 = vmatpush1.msra.mxu0 0.0
    %2115 = vmatprep.subr.mxu0 0.0
    %2116 = vmatpush1.msra.mxu0 0.0
    %2117 = vmatprep.subr.mxu0 0.0
    %2118 = vmatpush1.msra.mxu0 0.0
    %2119 = vmatprep.subr.mxu0 0.0
    %2120 = vmatpush1.msra.mxu0 0.0
    %2121 = vmatprep.subr.mxu0 0.0
    %2122 = vmatpush1.msra.mxu0 0.0
    %2123 = vmatprep.subr.mxu0 0.0
    %2124 = vmatpush1.msra.mxu0 0.0
    %2125 = vmatprep.subr.mxu0 0.0
    %2126 = vmatpush1.msra.mxu0 0.0
    %2127 = vmatprep.subr.mxu0 0.0
    %2128 = vmatpush1.msra.mxu0 0.0
    %2129 = vmatprep.subr.mxu0 0.0
    %2130 = vmatpush1.msra.mxu0 0.0
    %2131 = vmatprep.subr.mxu0 0.0
    %2132 = vmatpush1.msra.mxu0 0.0
    %2133 = vmatprep.subr.mxu0 0.0
    %2134 = vmatpush1.msra.mxu0 0.0
    %2135 = vmatprep.subr.mxu0 0.0
    %2136 = vmatpush1.msra.mxu0 0.0
    %2137 = vmatprep.subr.mxu0 0.0
    %2138 = vmatpush1.msra.mxu0 0.0
    %2139 = vmatprep.subr.mxu0 0.0
    %2140 = vmatpush1.msra.mxu0 0.0
    %2141 = vmatprep.subr.mxu0 0.0
    %2142 = vmatpush1.msra.mxu0 0.0
    %2143 = vmatprep.subr.mxu0 0.0
    %2144 = vmatpush1.msra.mxu0 0.0
    %2145 = vmatprep.subr.mxu0 0.0
    %2146 = vmatpush1.msra.mxu0 0.0
    %2147 = vmatprep.subr.mxu0 0.0
    %2148 = vmatpush1.msra.mxu0 0.0
    %2149 = vmatprep.subr.mxu0 0.0
    %2150 = vmatpush1.msra.mxu0 0.0
    %2151 = vmatprep.subr.mxu0 0.0
    %2152 = vmatpush1.msra.mxu0 0.0
    %2153 = vmatprep.subr.mxu0 0.0
    %2154 = vmatpush1.msra.mxu0 0.0
    %2155 = vmatprep.subr.mxu0 0.0
    %2156 = vmatpush1.msra.mxu0 0.0
    %2157 = vmatprep.subr.mxu0 0.0
    %2158 = vmatpush1.msra.mxu0 0.0
    %2159 = vmatprep.subr.mxu0 0.0
    %2160 = vmatpush1.msra.mxu0 0.0
    %2161 = vmatprep.subr.mxu0 0.0
    %2162 = vmatpush1.msra.mxu0 0.0
    %2163 = vmatprep.subr.mxu0 0.0
    %2164 = vmatpush1.msra.mxu0 0.0
    %2165 = vmatprep.subr.mxu0 0.0
    %2166 = vmatpush1.msra.mxu0 0.0
    %2167 = vmatprep.mubr.f32.mxu0 0.0
    %2168 = vmatmul.mubr.f32.gmra.mrb[0].mxu0 %v2098
    %v2169 = vpop.f32.mrb[0].mxu0
    %v2170 = vadd.f32 0.0, %v2169
    %v2171 = vpop.f32.mrb[0].mxu0
    %2172 = vmatprep.mubr.f32.mxu0 0.0
    %2173 = vmatmul.mubr.f32.gmra.mrb[0].mxu0 %v2101
    %v2174 = vpop.f32.mrb[0].mxu0
    %v2175 = vadd.f32 0.0, %v2174
    %v2176 = vpop.f32.mrb[0].mxu0
    %2177 = vdwg.mxu0
    %2180 = vrot.lane.b32.xlu0 %v1996, 8
    %v2181 = vpop.permute.xlu0 %2180
    %2182 = vrot.lane.b32.xlu0 %v2001, 8
    %v2183 = vpop.permute.xlu0 %2182
    %2188 = vrot.lane.b32.xlu0 %v2083, 16
    %v2189 = vpop.permute.xlu0 %2188
    %2190 = vrot.lane.b32.xlu0 %v2088, 16
    %v2191 = vpop.permute.xlu0 %2190
    %2196 = vrot.lane.b32.xlu0 %v2170, 24
    %v2197 = vpop.permute.xlu0 %2196
    %2198 = vrot.lane.b32.xlu0 %v2175, 24
    %v2199 = vpop.permute.xlu0 %2198
    %v2202 = vsel %vm434, %v1909, %v2181
    %v2203 = vsel %vm434, %v1914, %v2183
    %v2204 = vsel %vm779, %v2202, %v2189
    %v2205 = vsel %vm779, %v2203, %v2191
    %v2206 = vsel %vm1244, %v2204, %v2197
    %v2207 = vsel %vm1244, %v2205, %v2199
    %v2209 = vlaneseq
    %v2210 = vshrl.u32 %v2209, 7
    %v2211 = vsub.s32 0, %v2210
    %v2212 = vrot.slane %v1379, %v2211
    %v2215 = vsel %vm235, %v2206, 0
    %v2218 = vsel %vm235, %v2207, 0
    %2220 = vmatprep.subr.mxu0 0.0
    %2221 = vmatpush1.msra.mxu0 %v1374
    %2222 = vmatprep.subr.mxu0 0.0
    %2223 = vmatpush1.msra.mxu0 %v1375
    %2224 = vmatprep.subr.mxu0 0.0
    %2225 = vmatpush1.msra.mxu0 %v1376
    %2226 = vmatprep.subr.mxu0 0.0
    %2227 = vmatpush1.msra.mxu0 %v1377
    %2228 = vmatprep.subr.mxu0 0.0
    %2229 = vmatpush1.msra.mxu0 0.0
    %2230 = vmatprep.subr.mxu0 0.0
    %2231 = vmatpush1.msra.mxu0 0.0
    %2232 = vmatprep.subr.mxu0 0.0
    %2233 = vmatpush1.msra.mxu0 0.0
    %2234 = vmatprep.subr.mxu0 0.0
    %2235 = vmatpush1.msra.mxu0 0.0
    %2236 = vmatprep.subr.mxu0 0.0
    %2237 = vmatpush1.msra.mxu0 0.0
    %2238 = vmatprep.subr.mxu0 0.0
    %2239 = vmatpush1.msra.mxu0 0.0
    %2240 = vmatprep.subr.mxu0 0.0
    %2241 = vmatpush1.msra.mxu0 0.0
    %2242 = vmatprep.subr.mxu0 0.0
    %2243 = vmatpush1.msra.mxu0 0.0
    %2244 = vmatprep.subr.mxu0 0.0
    %2245 = vmatpush1.msra.mxu0 0.0
    %2246 = vmatprep.subr.mxu0 0.0
    %2247 = vmatpush1.msra.mxu0 0.0
    %2248 = vmatprep.subr.mxu0 0.0
    %2249 = vmatpush1.msra.mxu0 0.0
    %2250 = vmatprep.subr.mxu0 0.0
    %2251 = vmatpush1.msra.mxu0 0.0
    %2252 = vmatprep.subr.mxu0 0.0
    %2253 = vmatpush1.msra.mxu0 0.0
    %2254 = vmatprep.subr.mxu0 0.0
    %2255 = vmatpush1.msra.mxu0 0.0
    %2256 = vmatprep.subr.mxu0 0.0
    %2257 = vmatpush1.msra.mxu0 0.0
    %2258 = vmatprep.subr.mxu0 0.0
    %2259 = vmatpush1.msra.mxu0 0.0
    %2260 = vmatprep.subr.mxu0 0.0
    %2261 = vmatpush1.msra.mxu0 0.0
    %2262 = vmatprep.subr.mxu0 0.0
    %2263 = vmatpush1.msra.mxu0 0.0
    %2264 = vmatprep.subr.mxu0 0.0
    %2265 = vmatpush1.msra.mxu0 0.0
    %2266 = vmatprep.subr.mxu0 0.0
    %2267 = vmatpush1.msra.mxu0 0.0
    %2268 = vmatprep.subr.mxu0 0.0
    %2269 = vmatpush1.msra.mxu0 0.0
    %2270 = vmatprep.subr.mxu0 0.0
    %2271 = vmatpush1.msra.mxu0 0.0
    %2272 = vmatprep.subr.mxu0 0.0
    %2273 = vmatpush1.msra.mxu0 0.0
    %2274 = vmatprep.subr.mxu0 0.0
    %2275 = vmatpush1.msra.mxu0 0.0
    %2276 = vmatprep.subr.mxu0 0.0
    %2277 = vmatpush1.msra.mxu0 0.0
    %2278 = vmatprep.subr.mxu0 0.0
    %2279 = vmatpush1.msra.mxu0 0.0
    %2280 = vmatprep.subr.mxu0 0.0
    %2281 = vmatpush1.msra.mxu0 0.0
    %2282 = vmatprep.subr.mxu0 0.0
    %2283 = vmatpush1.msra.mxu0 0.0
    %2284 = vmatprep.mubr.f32.mxu0 0.0
    %2285 = vmatmul.mubr.f32.gmra.mrb[0].mxu0 %v2215
    %v2286 = vpop.f32.mrb[0].mxu0
    %v2287 = vadd.f32 %v2212, %v2286
    %v2288 = vpop.f32.mrb[0].mxu0
    %2289 = vmatprep.mubr.f32.mxu0 0.0
    %2290 = vmatmul.mubr.f32.gmra.mrb[0].mxu0 %v2218
    %v2291 = vpop.f32.mrb[0].mxu0
    %v2292 = vadd.f32 %v2212, %v2291
    %v2293 = vpop.f32.mrb[0].mxu0
    %2294 = vdwg.mxu0
    %v2295 = vadd.f32 %v2287, %v1369
    %v2296 = vadd.f32 %v2292, %v1370
    %s2297 = sld [smem:[#allocation9 + $0x2]]
    %s2298 = sld [smem:[#allocation9 + $0x3]]
    %v2299 = vsel %vm235, %v2295, 0.0
    %2300 = vadd.xlane.f32.xlu0 %v2299
    %v2301 = vpop.xlane.xlu0 %2300
    %v2302 = vsel %vm235, %v2296, 0.0
    %2303 = vadd.xlane.f32.xlu0 %v2302
    %v2304 = vpop.xlane.xlu0 %2303
    %v2305 = vmul.f32 %v2301, %v1344
    %v2306 = vmul.f32 %v2304, %v1344
    %v2307 = vsub.f32 %v2295, %v2305
    %v2308 = vsub.f32 %v2296, %v2306
    %v2309 = vmul.f32 %v2307, %v2307
    %v2310 = vmul.f32 %v2308, %v2308
    %v2311 = vsel %vm235, %v2309, 0.0
    %2312 = vadd.xlane.f32.xlu0 %v2311
    %v2313 = vpop.xlane.xlu0 %2312
    %v2314 = vsel %vm235, %v2310, 0.0
    %2315 = vadd.xlane.f32.xlu0 %v2314
    %v2316 = vpop.xlane.xlu0 %2315
    %v2317 = vmul.f32 %v2313, 0.032258064
    %v2318 = vmul.f32 %v2316, 0.032258064
    %v2319 = vstv %s2297
    %v2320 = vmul.f32 %v2319, %v2307
    %v2321 = vmul.f32 %v2319, %v2308
    %v2322 = vadd.f32 %v2317, 1e-06
    %v2323 = vadd.f32 %v2318, 1e-06
    %v2324 = vrsqrt.pop %v2322
    %v2325 = vrsqrt.pop %v2323
    %v2326 = vmul.f32 %v2320, %v2324
    %v2327 = vmul.f32 %v2321, %v2325
    %v2328 = vstv %s2298
    %v2329 = vadd.f32 %v2326, %v2328
    %v2330 = vadd.f32 %v2327, %v2328
    %v2331 = vld [vmem:[%s12] sm:$0xff]
    %v2332 = vld [vmem:[%s12 + $0x8] sm:$0xff]
    %v2333 = vld [vmem:[%s12 + $0x10] sm:$0xff]
    %v2334 = vld [vmem:[%s12 + $0x18] sm:$0xff]
    %v2335 = vld [vmem:[%s13] sm:$0x1]
    %v2337 = vlaneseq
    %v2338 = vshrl.u32 %v2337, 7
    %v2339 = vsub.s32 0, %v2338
    %v2340 = vrot.slane %v2335, %v2339
    %v2343 = vsel %vm235, %v2329, 0
    %v2346 = vsel %vm235, %v2330, 0
    %2348 = vmatprep.subr.mxu0 0.0
    %2349 = vmatpush1.msra.mxu0 %v2331
    %2350 = vmatprep.subr.mxu0 0.0
    %2351 = vmatpush1.msra.mxu0 %v2332
    %2352 = vmatprep.subr.mxu0 0.0
    %2353 = vmatpush1.msra.mxu0 %v2333
    %2354 = vmatprep.subr.mxu0 0.0
    %2355 = vmatpush1.msra.mxu0 %v2334
    %2356 = vmatprep.subr.mxu0 0.0
    %2357 = vmatpush1.msra.mxu0 0.0
    %2358 = vmatprep.subr.mxu0 0.0
    %2359 = vmatpush1.msra.mxu0 0.0
    %2360 = vmatprep.subr.mxu0 0.0
    %2361 = vmatpush1.msra.mxu0 0.0
    %2362 = vmatprep.subr.mxu0 0.0
    %2363 = vmatpush1.msra.mxu0 0.0
    %2364 = vmatprep.subr.mxu0 0.0
    %2365 = vmatpush1.msra.mxu0 0.0
    %2366 = vmatprep.subr.mxu0 0.0
    %2367 = vmatpush1.msra.mxu0 0.0
    %2368 = vmatprep.subr.mxu0 0.0
    %2369 = vmatpush1.msra.mxu0 0.0
    %2370 = vmatprep.subr.mxu0 0.0
    %2371 = vmatpush1.msra.mxu0 0.0
    %2372 = vmatprep.subr.mxu0 0.0
    %2373 = vmatpush1.msra.mxu0 0.0
    %2374 = vmatprep.subr.mxu0 0.0
    %2375 = vmatpush1.msra.mxu0 0.0
    %2376 = vmatprep.subr.mxu0 0.0
    %2377 = vmatpush1.msra.mxu0 0.0
    %2378 = vmatprep.subr.mxu0 0.0
    %2379 = vmatpush1.msra.mxu0 0.0
    %2380 = vmatprep.subr.mxu0 0.0
    %2381 = vmatpush1.msra.mxu0 0.0
    %2382 = vmatprep.subr.mxu0 0.0
    %2383 = vmatpush1.msra.mxu0 0.0
    %2384 = vmatprep.subr.mxu0 0.0
    %2385 = vmatpush1.msra.mxu0 0.0
    %2386 = vmatprep.subr.mxu0 0.0
    %2387 = vmatpush1.msra.mxu0 0.0
    %2388 = vmatprep.subr.mxu0 0.0
    %2389 = vmatpush1.msra.mxu0 0.0
    %2390 = vmatprep.subr.mxu0 0.0
    %2391 = vmatpush1.msra.mxu0 0.0
    %2392 = vmatprep.subr.mxu0 0.0
    %2393 = vmatpush1.msra.mxu0 0.0
    %2394 = vmatprep.subr.mxu0 0.0
    %2395 = vmatpush1.msra.mxu0 0.0
    %2396 = vmatprep.subr.mxu0 0.0
    %2397 = vmatpush1.msra.mxu0 0.0
    %2398 = vmatprep.subr.mxu0 0.0
    %2399 = vmatpush1.msra.mxu0 0.0
    %2400 = vmatprep.subr.mxu0 0.0
    %2401 = vmatpush1.msra.mxu0 0.0
    %2402 = vmatprep.subr.mxu0 0.0
    %2403 = vmatpush1.msra.mxu0 0.0
    %2404 = vmatprep.subr.mxu0 0.0
    %2405 = vmatpush1.msra.mxu0 0.0
    %2406 = vmatprep.subr.mxu0 0.0
    %2407 = vmatpush1.msra.mxu0 0.0
    %2408 = vmatprep.subr.mxu0 0.0
    %2409 = vmatpush1.msra.mxu0 0.0
    %2410 = vmatprep.subr.mxu0 0.0
    %2411 = vmatpush1.msra.mxu0 0.0
    %2412 = vmatprep.mubr.f32.mxu0 0.0
    %2413 = vmatmul.mubr.f32.gmra.mrb[0].mxu0 %v2343
    %v2414 = vpop.f32.mrb[0].mxu0
    %v2415 = vadd.f32 %v2340, %v2414
    %v2416 = vpop.f32.mrb[0].mxu0
    %2417 = vmatprep.mubr.f32.mxu0 0.0
    %2418 = vmatmul.mubr.f32.gmra.mrb[0].mxu0 %v2346
    %v2419 = vpop.f32.mrb[0].mxu0
    %v2420 = vadd.f32 %v2340, %v2419
    %v2421 = vpop.f32.mrb[0].mxu0
    %2422 = vdwg.mxu0
    %v2423 = vmax.f32 %v2415, 0.0
    %v2424 = vmax.f32 %v2420, 0.0
    %v2425 = vld [vmem:[%s14] sm:$0xff]
    %v2426 = vld [vmem:[%s14 + $0x8] sm:$0xff]
    %v2427 = vld [vmem:[%s14 + $0x10] sm:$0xff]
    %v2428 = vld [vmem:[%s14 + $0x18] sm:$0xff]
    %v2429 = vld [vmem:[%s14 + $0x20] sm:$0xff]
    %v2430 = vld [vmem:[%s14 + $0x28] sm:$0xff]
    %v2431 = vld [vmem:[%s14 + $0x30] sm:$0xff]
    %v2432 = vld [vmem:[%s14 + $0x38] sm:$0xff]
    %v2433 = vld [vmem:[%s15] sm:$0x1]
    %v2435 = vlaneseq
    %v2436 = vshrl.u32 %v2435, 7
    %v2437 = vsub.s32 0, %v2436
    %v2438 = vrot.slane %v2433, %v2437
    %vm2440 = vcmask 523264
    %v2442 = vsel %vm2440, %v2423, 0
    %v2445 = vsel %vm2440, %v2424, 0
    %2447 = vmatprep.subr.mxu0 0.0
    %2448 = vmatpush1.msra.mxu0 %v2425
    %2449 = vmatprep.subr.mxu0 0.0
    %2450 = vmatpush1.msra.mxu0 %v2426
    %2451 = vmatprep.subr.mxu0 0.0
    %2452 = vmatpush1.msra.mxu0 %v2427
    %2453 = vmatprep.subr.mxu0 0.0
    %2454 = vmatpush1.msra.mxu0 %v2428
    %2455 = vmatprep.subr.mxu0 0.0
    %2456 = vmatpush1.msra.mxu0 %v2429
    %2457 = vmatprep.subr.mxu0 0.0
    %2458 = vmatpush1.msra.mxu0 %v2430
    %2459 = vmatprep.subr.mxu0 0.0
    %2460 = vmatpush1.msra.mxu0 %v2431
    %2461 = vmatprep.subr.mxu0 0.0
    %2462 = vmatpush1.msra.mxu0 %v2432
    %2463 = vmatprep.subr.mxu0 0.0
    %2464 = vmatpush1.msra.mxu0 0.0
    %2465 = vmatprep.subr.mxu0 0.0
    %2466 = vmatpush1.msra.mxu0 0.0
    %2467 = vmatprep.subr.mxu0 0.0
    %2468 = vmatpush1.msra.mxu0 0.0
    %2469 = vmatprep.subr.mxu0 0.0
    %2470 = vmatpush1.msra.mxu0 0.0
    %2471 = vmatprep.subr.mxu0 0.0
    %2472 = vmatpush1.msra.mxu0 0.0
    %2473 = vmatprep.subr.mxu0 0.0
    %2474 = vmatpush1.msra.mxu0 0.0
    %2475 = vmatprep.subr.mxu0 0.0
    %2476 = vmatpush1.msra.mxu0 0.0
    %2477 = vmatprep.subr.mxu0 0.0
    %2478 = vmatpush1.msra.mxu0 0.0
    %2479 = vmatprep.subr.mxu0 0.0
    %2480 = vmatpush1.msra.mxu0 0.0
    %2481 = vmatprep.subr.mxu0 0.0
    %2482 = vmatpush1.msra.mxu0 0.0
    %2483 = vmatprep.subr.mxu0 0.0
    %2484 = vmatpush1.msra.mxu0 0.0
    %2485 = vmatprep.subr.mxu0 0.0
    %2486 = vmatpush1.msra.mxu0 0.0
    %2487 = vmatprep.subr.mxu0 0.0
    %2488 = vmatpush1.msra.mxu0 0.0
    %2489 = vmatprep.subr.mxu0 0.0
    %2490 = vmatpush1.msra.mxu0 0.0
    %2491 = vmatprep.subr.mxu0 0.0
    %2492 = vmatpush1.msra.mxu0 0.0
    %2493 = vmatprep.subr.mxu0 0.0
    %2494 = vmatpush1.msra.mxu0 0.0
    %2495 = vmatprep.subr.mxu0 0.0
    %2496 = vmatpush1.msra.mxu0 0.0
    %2497 = vmatprep.subr.mxu0 0.0
    %2498 = vmatpush1.msra.mxu0 0.0
    %2499 = vmatprep.subr.mxu0 0.0
    %2500 = vmatpush1.msra.mxu0 0.0
    %2501 = vmatprep.subr.mxu0 0.0
    %2502 = vmatpush1.msra.mxu0 0.0
    %2503 = vmatprep.subr.mxu0 0.0
    %2504 = vmatpush1.msra.mxu0 0.0
    %2505 = vmatprep.subr.mxu0 0.0
    %2506 = vmatpush1.msra.mxu0 0.0
    %2507 = vmatprep.subr.mxu0 0.0
    %2508 = vmatpush1.msra.mxu0 0.0
    %2509 = vmatprep.subr.mxu0 0.0
    %2510 = vmatpush1.msra.mxu0 0.0
    %2511 = vmatprep.mubr.f32.mxu0 0.0
    %2512 = vmatmul.mubr.f32.gmra.mrb[0].mxu0 %v2442
    %v2513 = vpop.f32.mrb[0].mxu0
    %v2514 = vadd.f32 %v2438, %v2513
    %v2515 = vpop.f32.mrb[0].mxu0
    %2516 = vmatprep.mubr.f32.mxu0 0.0
    %2517 = vmatmul.mubr.f32.gmra.mrb[0].mxu0 %v2445
    %v2518 = vpop.f32.mrb[0].mxu0
    %v2519 = vadd.f32 %v2438, %v2518
    %v2520 = vpop.f32.mrb[0].mxu0
    %2521 = vdwg.mxu0
    %v2522 = vadd.f32 %v2329, %v2514
    %v2523 = vadd.f32 %v2330, %v2519
    %s2524 = sld [smem:[#allocation9 + $0x4]]
    %s2525 = sld [smem:[#allocation9 + $0x5]]
    %v2526 = vsel %vm235, %v2522, 0.0
    %2527 = vadd.xlane.f32.xlu0 %v2526
    %v2528 = vpop.xlane.xlu0 %2527
    %v2529 = vsel %vm235, %v2523, 0.0
    %2530 = vadd.xlane.f32.xlu0 %v2529
    %v2531 = vpop.xlane.xlu0 %2530
    %v2532 = vmul.f32 %v2528, %v1344
    %v2533 = vmul.f32 %v2531, %v1344
    %v2534 = vsub.f32 %v2522, %v2532
    %v2535 = vsub.f32 %v2523, %v2533
    %v2536 = vmul.f32 %v2534, %v2534
    %v2537 = vmul.f32 %v2535, %v2535
    %v2538 = vsel %vm235, %v2536, 0.0
    %2539 = vadd.xlane.f32.xlu0 %v2538
    %v2540 = vpop.xlane.xlu0 %2539
    %v2541 = vsel %vm235, %v2537, 0.0
    %2542 = vadd.xlane.f32.xlu0 %v2541
    %v2543 = vpop.xlane.xlu0 %2542
    %v2544 = vmul.f32 %v2540, 0.032258064
    %v2545 = vmul.f32 %v2543, 0.032258064
    %v2546 = vstv %s2524
    %v2547 = vmul.f32 %v2546, %v2534
    %v2548 = vmul.f32 %v2546, %v2535
    %v2549 = vadd.f32 %v2544, 1e-06
    %v2550 = vadd.f32 %v2545, 1e-06
    %v2551 = vrsqrt.pop %v2549
    %v2552 = vrsqrt.pop %v2550
    %v2553 = vmul.f32 %v2547, %v2551
    %v2554 = vmul.f32 %v2548, %v2552
    %v2555 = vstv %s2525
    %v2556 = vadd.f32 %v2553, %v2555
    %v2557 = vadd.f32 %v2554, %v2555
    %2558 = vst.msk [vmem:[#allocation10] sm:$0xff] %vm235, %v2556
    %2559 = vst.msk [vmem:[#allocation10 + $0x8] sm:$0xff] %vm235, %v2557
    // Predicated region
    $region86: #{tpu_custom_call.1} parent=1 // pred_check
      _
    $region87: #{tpu_custom_call.1} parent=1 // pred_check_branch
      %2561 = sbr.rel (0) target = $region89
    $region88: #{tpu_custom_call.1} parent=1 // pred_region
      %s2563 = ssub.s32 256, 256
      %2564 = vsyncadd [#allocation4], %s2563
      %s2565 = sshll.u32 [#allocation10], 4
      %s2566 = int_to_ptr.vmem [resolvable:$true] %s2565
      %2571 = dma.vmem_to_hbm [thread:$0]  %s2566, 256, %s17, [#allocation4], 128, 128, 8
    $region89: #{tpu_custom_call.1} parent=1 // pred_fallthru
      _
    // Predicated region
    $region90: #{tpu_custom_call.1} parent=1 // pred_check
      _
    $region91: #{tpu_custom_call.1} parent=1 // pred_check_branch
      %2573 = sbr.rel (0) target = $region93
    $region92: #{tpu_custom_call.1} parent=1 // pred_region
      %2574 = dma.done [#allocation4], 256
    $region93: #{tpu_custom_call.1} parent=1 // pred_fallthru
      _
    %2575 = vsyncpa [#allocation3], 1
    %2576 = vsyncpa [#allocation7], 1
    %2577 = vsyncpa [#allocation4], 1
    %2578 = vsyncpa [#allocation5], 1

</llo_original>
